<compile_context>
chip_gen: v5e
topology: v5e:2x2
jax: 0.10.0
libtpu: 0.0.40
codegen_flags: <defaults>
</compile_context>

<pallas_src>
import jax
import jax.numpy as jnp
from jax.experimental import pallas as pl
from jax.experimental.pallas import tpu as pltpu

EMB_D = 32      # embedding dim
LSTM_H = 64     # LSTM hidden size
FC1_D = 128     # fc1 output width == conv length
CONV_C = 8      # conv output channels
POOL_L = 64     # pooled length (128, k=3, s=2, p=1)
OUT_D = 10      # fc2 output
BN_EPS = 1e-5


def _nn_kernel(emb_ref,                       # (T, TB, 32)  bf16
               w_ih_ref, w_hh_ref,            # (32, 256) (64, 256)  bf16
               b_lstm_ref,                    # (1, 256)  f32
               w1_ref,                        # (64, 384)  bf16  [left | mid | right]
               b1_ref,                        # (1, 384)   f32
               bn_scale_ref, bn_shift_ref,    # (1, 384)   f32 (edge lanes zeroed)
               cw_ref,                        # (8, 4, 128) f32  conv taps+bias, lane-bcast
               w2_ref,                        # (8, 64, 10) f32
               b2_ref,                        # (1, 10)     f32
               out_ref,                       # (TB, 10)    f32
               xg_ref):                       # scratch (T, TB, 256) f32
    T, TB, _ = emb_ref.shape
    H = LSTM_H

    # ---- (1) hoisted input-side LSTM matmul (independent across t, off the
    #          recurrent critical path); gate bias folded in once here. ----
    @pl.loop(0, T)
    def _hoist(t):
        xg_ref[t] = (jnp.dot(emb_ref[t], w_ih_ref[...],
                             preferred_element_type=jnp.float32)
                     + b_lstm_ref[...])

    # ---- (2) recurrence: single fused-gate matmul per step. ----
    def lstm_step(t, carry):
        h, c = carry
        gates = xg_ref[t] + jnp.dot(h.astype(jnp.bfloat16), w_hh_ref[...],
                                    preferred_element_type=jnp.float32)
        i_g = jax.nn.sigmoid(gates[:, 0 * H:1 * H])
        f_g = jax.nn.sigmoid(gates[:, 1 * H:2 * H])
        g_g = jnp.tanh(gates[:, 2 * H:3 * H])
        o_g = jax.nn.sigmoid(gates[:, 3 * H:4 * H])
        c_new = f_g * c + i_g * g_g
        h_new = o_g * jnp.tanh(c_new)
        return h_new, c_new

    h0 = jnp.zeros((TB, H), jnp.float32)
    c0 = jnp.zeros((TB, H), jnp.float32)
    h_last, _ = jax.lax.fori_loop(0, T, lstm_step, (h0, c0))   # lstm[:, -1, :]

    # ---- (3) widened fc1 + ReLU + eval-mode BatchNorm.
    #      w1_ref = [roll(W1,+1) | W1 | roll(W1,-1)], so lanes [0:128] are
    #      x[l-1], [128:256] are x[l], [256:384] are x[l+1] after the
    #      position-wise BN; the wrapper zeroed scale/shift of lanes 0 and 383
    #      so the conv zero padding is exact.  No shift matrices / matmuls. ----
    u = (jnp.dot(h_last.astype(jnp.bfloat16), w1_ref[...],
                 preferred_element_type=jnp.float32) + b1_ref[...])
    xarr = jnp.maximum(u, 0.0) * bn_scale_ref[...] + bn_shift_ref[...]
    # TODO(synk): Dropout(0.5) is the identity in eval mode.
    x_left = xarr[:, 0:FC1_D]
    x_mid = xarr[:, FC1_D:2 * FC1_D]
    x_right = xarr[:, 2 * FC1_D:3 * FC1_D]

    # ---- (4) MaxPool selection matrix generated in-kernel (no HBM constant).
    #      Column k*64 + j selects conv position 2j - 1 + k (missing taps give
    #      a zero column, safe because z >= 0 after ReLU). ----
    row = jax.lax.broadcasted_iota(jnp.int32, (FC1_D, 3 * POOL_L), 0)
    col = jax.lax.broadcasted_iota(jnp.int32, (FC1_D, 3 * POOL_L), 1)
    target = 2 * (col & (POOL_L - 1)) + (col >> 6) - 1        # POOL_L == 64
    a_cat = (row == target).astype(jnp.float32)               # (128, 192)

    # ---- (5) Conv1d(1->8,k=3,p=1) + ReLU + MaxPool1d(3,2,1) + fc2, one
    #      channel per iteration; fori_loop(unroll=True) bounds live ranges. ----
    def chan_step(cc, acc):
        cw = cw_ref[cc]                                       # (4, 128)
        z = jnp.maximum(cw[0:1, :] * x_left + cw[1:2, :] * x_mid
                        + cw[2:3, :] * x_right + cw[3:4, :], 0.0)   # (TB,128)
        pz = jnp.dot(z, a_cat, preferred_element_type=jnp.float32)  # (TB,192)
        pooled = jnp.maximum(
            jnp.maximum(pz[:, 0:POOL_L], pz[:, POOL_L:2 * POOL_L]),
            pz[:, 2 * POOL_L:3 * POOL_L])                           # (TB,64)
        # Flatten order is (channel, length): fold fc2 per channel.
        return acc + jnp.dot(pooled, w2_ref[cc],
                             preferred_element_type=jnp.float32)

    acc0 = jnp.zeros((TB, OUT_D), jnp.float32) + b2_ref[...]
    out_ref[...] = jax.lax.fori_loop(0, CONV_C, chan_step, acc0, unroll=True)


def _full_spec(shape):
    zeros = (0,) * len(shape)
    return pl.BlockSpec(shape, lambda i: zeros)


def neural_network_forward(tokens, p):
    B, T = tokens.shape
    H = LSTM_H

    # --- glue: embedding gather + parameter re-layout (no hot-path compute) ---
    # Gather directly in (T, B, 32) time-major order (no (B,T,32) round trip),
    # in bf16 so the dominant HBM stream is half width.
    emb_t = jnp.take(p["embed"].astype(jnp.bfloat16), tokens.T, axis=0)  # (T,B,32)

    w_ih = p["w_ih"].astype(jnp.bfloat16)                     # (32, 256) fused i|f|g|o
    w_hh = p["w_hh"].astype(jnp.bfloat16)                     # (64, 256)
    b_lstm = p["b_lstm"].reshape(1, 4 * H)

    # fc1 + folded BatchNorm, plus column-rolled copies so the kernel gets the
    # conv's left/right neighbours from the same matmul.
    scale = p["bn_gamma"] * jax.lax.rsqrt(p["bn_var"] + BN_EPS)
    shift = p["bn_beta"] - p["bn_mean"] * scale

    def lcr(v, axis):
        return jnp.concatenate(
            [jnp.roll(v, 1, axis=axis), v, jnp.roll(v, -1, axis=axis)], axis=axis)

    w1_cat = lcr(p["w1"], 1).astype(jnp.bfloat16)             # (64, 384)
    b1_cat = lcr(p["b1"], 0).reshape(1, 3 * FC1_D)
    scale_cat = lcr(scale, 0)
    shift_cat = lcr(shift, 0)
    lane = jnp.arange(3 * FC1_D)
    edge = (lane == 0) | (lane == 3 * FC1_D - 1)              # wrapped lanes -> conv pad
    scale_cat = jnp.where(edge, 0.0, scale_cat).reshape(1, 3 * FC1_D)
    shift_cat = jnp.where(edge, 0.0, shift_cat).reshape(1, 3 * FC1_D)

    # conv taps + bias, broadcast across lanes: (8, 4, 128).
    conv_w = jnp.concatenate([p["wc"], p["bc"][:, None]], axis=1)        # (8, 4)
    conv_w = jnp.broadcast_to(conv_w[:, :, None], (CONV_C, 4, FC1_D))
    conv_w = conv_w.astype(jnp.float32)

    w2 = p["w2"].reshape(CONV_C, POOL_L, OUT_D)               # flat index = c*64 + l
    b2 = p["b2"].reshape(1, OUT_D)

    # --- batch-tiled grid (v7x-safe block sizes; tb = B for small batches) ---
    tb = B
    for cand in (512, 256, 128):
        if B % cand == 0:
            tb = cand
            break
    grid = (B // tb,)

    grid_spec = pltpu.PrefetchScalarGridSpec(
        num_scalar_prefetch=0,
        grid=grid,
        in_specs=[
            pl.BlockSpec((T, tb, EMB_D), lambda i: (0, i, 0)),
            _full_spec((EMB_D, 4 * H)),
            _full_spec((H, 4 * H)),
            _full_spec((1, 4 * H)),
            _full_spec((H, 3 * FC1_D)),
            _full_spec((1, 3 * FC1_D)),
            _full_spec((1, 3 * FC1_D)),
            _full_spec((1, 3 * FC1_D)),
            _full_spec((CONV_C, 4, FC1_D)),
            _full_spec((CONV_C, POOL_L, OUT_D)),
            _full_spec((1, OUT_D)),
        ],
        out_specs=pl.BlockSpec((tb, OUT_D), lambda i: (i, 0)),
        scratch_shapes=[pltpu.VMEM((T, tb, 4 * H), jnp.float32)],
    )

    return pl.pallas_call(
        _nn_kernel,
        out_shape=jax.ShapeDtypeStruct((B, OUT_D), jnp.float32),
        grid_spec=grid_spec,
        compiler_params=pltpu.CompilerParams(
            dimension_semantics=("parallel",),
            vmem_limit_bytes=32 * 1024 * 1024,
        ),
    )(emb_t, w_ih, w_hh, b_lstm, w1_cat, b1_cat, scale_cat, shift_cat,
      conv_w, w2, b2)


def reference_forward(tokens, p):
    """Pure-JAX f32 reference (same math, standard formulation)."""
    hp = jax.lax.Precision.HIGHEST
    emb = p["embed"][tokens]
    B = emb.shape[0]
    H = LSTM_H

    def step(carry, x_t):
        h, c = carry
        gates = (jnp.dot(x_t, p["w_ih"], precision=hp)
                 + jnp.dot(h, p["w_hh"], precision=hp) + p["b_lstm"])
        i = jax.nn.sigmoid(gates[:, 0:H])
        f = jax.nn.sigmoid(gates[:, H:2 * H])
        g = jnp.tanh(gates[:, 2 * H:3 * H])
        o = jax.nn.sigmoid(gates[:, 3 * H:4 * H])
        c = f * c + i * g
        h = o * jnp.tanh(c)
        return (h, c), None

    (h, _), _ = jax.lax.scan(step, (jnp.zeros((B, H)), jnp.zeros((B, H))),
                             jnp.swapaxes(emb, 0, 1))
    x = jnp.maximum(jnp.dot(h, p["w1"], precision=hp) + p["b1"], 0.0)
    x = ((x - p["bn_mean"]) / jnp.sqrt(p["bn_var"] + BN_EPS)
         * p["bn_gamma"] + p["bn_beta"])
    xp = jnp.pad(x, ((0, 0), (1, 1)))
    taps = jnp.stack([xp[:, k:k + FC1_D] for k in range(3)], axis=-1)   # (B,128,3)
    y = jnp.einsum("blk,ok->bol", taps, p["wc"], precision=hp) + p["bc"][None, :, None]
    y = jnp.maximum(y, 0.0)
    yp = jnp.pad(y, ((0, 0), (0, 0), (1, 1)), constant_values=-jnp.inf)
    pooled = jnp.maximum(jnp.maximum(yp[:, :, 0:128:2], yp[:, :, 1:129:2]),
                         yp[:, :, 2:130:2])                              # (B,8,64)
    flat = pooled.reshape(B, CONV_C * POOL_L)
    return jnp.dot(flat, p["w2"], precision=hp) + p["b2"]


def init_params(key, vocab_size):
    ks = jax.random.split(key, 10)
    s = 0.1
    return {
        "embed": jax.random.normal(ks[0], (vocab_size, EMB_D), jnp.float32) * s,
        "w_ih": jax.random.normal(ks[1], (EMB_D, 4 * LSTM_H), jnp.float32) * s,
        "w_hh": jax.random.normal(ks[2], (LSTM_H, 4 * LSTM_H), jnp.float32) * s,
        "b_lstm": jax.random.normal(ks[3], (4 * LSTM_H,), jnp.float32) * s,
        "w1": jax.random.normal(ks[4], (LSTM_H, FC1_D), jnp.float32) * s,
        "b1": jax.random.normal(ks[5], (FC1_D,), jnp.float32) * s,
        "bn_gamma": jnp.ones((FC1_D,), jnp.float32),
        "bn_beta": jnp.zeros((FC1_D,), jnp.float32),
        "bn_mean": jnp.zeros((FC1_D,), jnp.float32),
        "bn_var": jnp.ones((FC1_D,), jnp.float32),
        "wc": jax.random.normal(ks[6], (CONV_C, 3), jnp.float32) * s,
        "bc": jax.random.normal(ks[7], (CONV_C,), jnp.float32) * s,
        "w2": jax.random.normal(ks[8], (CONV_C * POOL_L, OUT_D), jnp.float32) * s,
        "b2": jax.random.normal(ks[9], (OUT_D,), jnp.float32) * s,
    }


if __name__ == "__main__":
    key = jax.random.PRNGKey(0)
    k_tok, k_par = jax.random.split(key)
    VOCAB, B, T = 50, 2, 8
    tokens = jax.random.randint(k_tok, (B, T), 0, VOCAB, dtype=jnp.int32)
    params = init_params(k_par, VOCAB)

    out = jax.jit(neural_network_forward)(tokens, params)
    out = jax.block_until_ready(out)
    assert out.shape == (B, OUT_D)

    ref = reference_forward(tokens, params)
    # bf16 weights/activations feed the LSTM/fc1 matmuls (f32 accumulation),
    # hence the slightly relaxed tolerance vs the f32 HIGHEST reference.
    err = float(jnp.max(jnp.abs(out - ref)))
    assert jnp.allclose(out, ref, rtol=1e-2, atol=1e-2), ("mismatch", err)
    print("KERNEL_OK")
</pallas_src>

<mosaic_0001>
module attributes {stable_mosaic.version = 11 : i64} {
  func.func @_nn_kernel(%arg0: i32, %arg1: memref<8x2x32xbf16, #tpu.memory_space<vmem>>, %arg2: memref<32x256xbf16, #tpu.memory_space<vmem>>, %arg3: memref<64x256xbf16, #tpu.memory_space<vmem>>, %arg4: memref<1x256xf32, #tpu.memory_space<vmem>>, %arg5: memref<64x384xbf16, #tpu.memory_space<vmem>>, %arg6: memref<1x384xf32, #tpu.memory_space<vmem>>, %arg7: memref<1x384xf32, #tpu.memory_space<vmem>>, %arg8: memref<1x384xf32, #tpu.memory_space<vmem>>, %arg9: memref<8x4x128xf32, #tpu.memory_space<vmem>>, %arg10: memref<8x64x10xf32, #tpu.memory_space<vmem>>, %arg11: memref<1x10xf32, #tpu.memory_space<vmem>>, %arg12: memref<2x10xf32, #tpu.memory_space<vmem>>, %arg13: memref<8x2x256xf32, #tpu.memory_space<vmem>>) attributes {dimension_semantics = [#tpu.dimension_semantics<parallel>], iteration_bounds = array<i64: 1>, scalar_prefetch = 0 : i64, scratch_operands = 1 : i64, tpu.core_type = #tpu.core_type<tc>, window_params = [{transform_indices = @transform_0, window_bounds = array<i64: 8, 2, 32>}, {pipeline_mode = #tpu.pipeline_mode<synchronous>, transform_indices = @transform_1, window_bounds = array<i64: 32, 256>}, {pipeline_mode = #tpu.pipeline_mode<synchronous>, transform_indices = @transform_2, window_bounds = array<i64: 64, 256>}, {pipeline_mode = #tpu.pipeline_mode<synchronous>, transform_indices = @transform_3, window_bounds = array<i64: 1, 256>}, {pipeline_mode = #tpu.pipeline_mode<synchronous>, transform_indices = @transform_4, window_bounds = array<i64: 64, 384>}, {pipeline_mode = #tpu.pipeline_mode<synchronous>, transform_indices = @transform_5, window_bounds = array<i64: 1, 384>}, {pipeline_mode = #tpu.pipeline_mode<synchronous>, transform_indices = @transform_6, window_bounds = array<i64: 1, 384>}, {pipeline_mode = #tpu.pipeline_mode<synchronous>, transform_indices = @transform_7, window_bounds = array<i64: 1, 384>}, {pipeline_mode = #tpu.pipeline_mode<synchronous>, transform_indices = @transform_8, window_bounds = array<i64: 8, 4, 128>}, {pipeline_mode = #tpu.pipeline_mode<synchronous>, transform_indices = @transform_9, window_bounds = array<i64: 8, 64, 10>}, {pipeline_mode = #tpu.pipeline_mode<synchronous>, transform_indices = @transform_10, window_bounds = array<i64: 1, 10>}, {transform_indices = @transform_11, window_bounds = array<i64: 2, 10>}]} {
    %c0_i32 = arith.constant 0 : i32
    %c8_i32 = arith.constant 8 : i32
    %0 = arith.addi %c0_i32, %c8_i32 : i32
    %c1_i32 = arith.constant 1 : i32
    scf.for %arg14 = %c0_i32 to %0 step %c1_i32  : i32 {
      %c1_i32_82 = arith.constant 1 : i32
      %281 = arith.muli %arg14, %c1_i32_82 : i32
      %c0_i32_83 = arith.constant 0 : i32
      %282 = arith.addi %c0_i32_83, %281 : i32
      %283 = arith.index_cast %282 : i32 to index
      %c0_84 = arith.constant 0 : index
      %c0_85 = arith.constant 0 : index
      %284 = vector.load %arg1[%283, %c0_84, %c0_85] : memref<8x2x32xbf16, #tpu.memory_space<vmem>>, vector<1x2x32xbf16>
      %285 = vector.shape_cast %284 : vector<1x2x32xbf16> to vector<2x32xbf16>
      %c0_86 = arith.constant 0 : index
      %c0_87 = arith.constant 0 : index
      %286 = vector.load %arg2[%c0_86, %c0_87] : memref<32x256xbf16, #tpu.memory_space<vmem>>, vector<32x256xbf16>
      %cst_88 = arith.constant dense<0.000000e+00> : vector<2x256xf32>
      %287 = tpu.matmul %285, %286, %cst_88 {dimension_numbers = #tpu.dot_dimension_numbers<[1], [0], [0], [1], [0, 0, 1, 1], [], []>} : vector<2x32xbf16>, vector<32x256xbf16>, vector<2x256xf32> -> vector<2x256xf32>
      %c0_89 = arith.constant 0 : index
      %c0_90 = arith.constant 0 : index
      %288 = vector.load %arg4[%c0_89, %c0_90] : memref<1x256xf32, #tpu.memory_space<vmem>>, vector<1x256xf32>
      %289 = vector.broadcast %288 : vector<1x256xf32> to vector<2x256xf32>
      %290 = arith.addf %287, %289 : vector<2x256xf32>
      %291 = arith.index_cast %282 : i32 to index
      %c0_91 = arith.constant 0 : index
      %c0_92 = arith.constant 0 : index
      %292 = vector.load %arg13[%291, %c0_91, %c0_92] : memref<8x2x256xf32, #tpu.memory_space<vmem>>, vector<1x2x256xf32>
      %293 = vector.shape_cast %292 : vector<1x2x256xf32> to vector<2x256xf32>
      %294 = vector.shape_cast %290 : vector<2x256xf32> to vector<1x2x256xf32>
      tpu.vector_store %arg13[%291, %c0_91, %c0_92], %294 {strides = array<i32>} : memref<8x2x256xf32, #tpu.memory_space<vmem>>, vector<1x2x256xf32>,
    }
    %c8_i32_0 = arith.constant 8 : i32
    %cst = arith.constant 0.000000e+00 : f32
    %1 = vector.broadcast %cst : f32 to vector<2x64xf32>
    %cst_1 = arith.constant 0.000000e+00 : f32
    %2 = vector.broadcast %cst_1 : f32 to vector<2x64xf32>
    %c0_i32_2 = arith.constant 0 : i32
    %c8_i32_3 = arith.constant 8 : i32
    %3 = arith.addi %c0_i32_2, %c8_i32_3 : i32
    %c1_i32_4 = arith.constant 1 : i32
    %4:2 = scf.for %arg14 = %c0_i32_2 to %3 step %c1_i32_4 iter_args(%arg15 = %1, %arg16 = %2) -> (vector<2x64xf32>, vector<2x64xf32>)  : i32 {
      %281 = arith.index_cast %arg14 : i32 to index
      %c0_82 = arith.constant 0 : index
      %c0_83 = arith.constant 0 : index
      %282 = vector.load %arg13[%281, %c0_82, %c0_83] : memref<8x2x256xf32, #tpu.memory_space<vmem>>, vector<1x2x256xf32>
      %283 = vector.shape_cast %282 : vector<1x2x256xf32> to vector<2x256xf32>
      %284 = arith.truncf %arg15 : vector<2x64xf32> to vector<2x64xbf16>
      %c0_84 = arith.constant 0 : index
      %c0_85 = arith.constant 0 : index
      %285 = vector.load %arg3[%c0_84, %c0_85] : memref<64x256xbf16, #tpu.memory_space<vmem>>, vector<64x256xbf16>
      %cst_86 = arith.constant dense<0.000000e+00> : vector<2x256xf32>
      %286 = tpu.matmul %284, %285, %cst_86 {dimension_numbers = #tpu.dot_dimension_numbers<[1], [0], [0], [1], [0, 0, 1, 1], [], []>} : vector<2x64xbf16>, vector<64x256xbf16>, vector<2x256xf32> -> vector<2x256xf32>
      %287 = arith.addf %283, %286 : vector<2x256xf32>
      %288 = vector.extract_strided_slice %287 {offsets = [0, 0], sizes = [2, 64], strides = [1, 1]} : vector<2x256xf32> to vector<2x64xf32>
      %289 = arith.negf %288 : vector<2x64xf32>
      %290 = math.exp %289 : vector<2x64xf32>
      %cst_87 = arith.constant 1.000000e+00 : f32
      %291 = vector.broadcast %cst_87 : f32 to vector<2x64xf32>
      %292 = arith.addf %291, %290 : vector<2x64xf32>
      %293 = arith.divf %291, %292 : vector<2x64xf32>
      %294 = vector.extract_strided_slice %287 {offsets = [0, 64], sizes = [2, 64], strides = [1, 1]} : vector<2x256xf32> to vector<2x64xf32>
      %295 = arith.negf %294 : vector<2x64xf32>
      %296 = math.exp %295 : vector<2x64xf32>
      %cst_88 = arith.constant 1.000000e+00 : f32
      %297 = vector.broadcast %cst_88 : f32 to vector<2x64xf32>
      %298 = arith.addf %297, %296 : vector<2x64xf32>
      %299 = arith.divf %297, %298 : vector<2x64xf32>
      %300 = vector.extract_strided_slice %287 {offsets = [0, 128], sizes = [2, 64], strides = [1, 1]} : vector<2x256xf32> to vector<2x64xf32>
      %301 = math.tanh %300 : vector<2x64xf32>
      %302 = vector.extract_strided_slice %287 {offsets = [0, 192], sizes = [2, 64], strides = [1, 1]} : vector<2x256xf32> to vector<2x64xf32>
      %303 = arith.negf %302 : vector<2x64xf32>
      %304 = math.exp %303 : vector<2x64xf32>
      %cst_89 = arith.constant 1.000000e+00 : f32
      %305 = vector.broadcast %cst_89 : f32 to vector<2x64xf32>
      %306 = arith.addf %305, %304 : vector<2x64xf32>
      %307 = arith.divf %305, %306 : vector<2x64xf32>
      %308 = arith.mulf %299, %arg16 : vector<2x64xf32>
      %309 = arith.mulf %293, %301 : vector<2x64xf32>
      %310 = arith.addf %308, %309 : vector<2x64xf32>
      %311 = math.tanh %310 : vector<2x64xf32>
      %312 = arith.mulf %307, %311 : vector<2x64xf32>
      scf.yield %312, %310 : vector<2x64xf32>, vector<2x64xf32>
    }
    %c8_i32_5 = arith.constant 8 : i32
    %5 = arith.truncf %4#0 : vector<2x64xf32> to vector<2x64xbf16>
    %c0 = arith.constant 0 : index
    %c0_6 = arith.constant 0 : index
    %6 = vector.load %arg5[%c0, %c0_6] : memref<64x384xbf16, #tpu.memory_space<vmem>>, vector<64x384xbf16>
    %cst_7 = arith.constant dense<0.000000e+00> : vector<2x384xf32>
    %7 = tpu.matmul %5, %6, %cst_7 {dimension_numbers = #tpu.dot_dimension_numbers<[1], [0], [0], [1], [0, 0, 1, 1], [], []>} : vector<2x64xbf16>, vector<64x384xbf16>, vector<2x384xf32> -> vector<2x384xf32>
    %c0_8 = arith.constant 0 : index
    %c0_9 = arith.constant 0 : index
    %8 = vector.load %arg6[%c0_8, %c0_9] : memref<1x384xf32, #tpu.memory_space<vmem>>, vector<1x384xf32>
    %9 = vector.broadcast %8 : vector<1x384xf32> to vector<2x384xf32>
    %10 = arith.addf %7, %9 : vector<2x384xf32>
    %cst_10 = arith.constant 0.000000e+00 : f32
    %11 = vector.broadcast %cst_10 : f32 to vector<2x384xf32>
    %12 = arith.maximumf %10, %11 : vector<2x384xf32>
    %c0_11 = arith.constant 0 : index
    %c0_12 = arith.constant 0 : index
    %13 = vector.load %arg7[%c0_11, %c0_12] : memref<1x384xf32, #tpu.memory_space<vmem>>, vector<1x384xf32>
    %14 = vector.broadcast %13 : vector<1x384xf32> to vector<2x384xf32>
    %15 = arith.mulf %12, %14 : vector<2x384xf32>
    %c0_13 = arith.constant 0 : index
    %c0_14 = arith.constant 0 : index
    %16 = vector.load %arg8[%c0_13, %c0_14] : memref<1x384xf32, #tpu.memory_space<vmem>>, vector<1x384xf32>
    %17 = vector.broadcast %16 : vector<1x384xf32> to vector<2x384xf32>
    %18 = arith.addf %15, %17 : vector<2x384xf32>
    %19 = vector.extract_strided_slice %18 {offsets = [0, 0], sizes = [2, 128], strides = [1, 1]} : vector<2x384xf32> to vector<2x128xf32>
    %20 = vector.extract_strided_slice %18 {offsets = [0, 128], sizes = [2, 128], strides = [1, 1]} : vector<2x384xf32> to vector<2x128xf32>
    %21 = vector.extract_strided_slice %18 {offsets = [0, 256], sizes = [2, 128], strides = [1, 1]} : vector<2x384xf32> to vector<2x128xf32>
    %22 = tpu.iota {dimensions = array<i32: 0>} : vector<128x192xi32>
    %23 = tpu.iota {dimensions = array<i32: 1>} : vector<128x192xi32>
    %c63_i32 = arith.constant 63 : i32
    %24 = vector.broadcast %c63_i32 : i32 to vector<128x192xi32>
    %25 = arith.andi %23, %24 : vector<128x192xi32>
    %c2_i32 = arith.constant 2 : i32
    %26 = vector.broadcast %c2_i32 : i32 to vector<128x192xi32>
    %27 = arith.muli %26, %25 : vector<128x192xi32>
    %c6_i32 = arith.constant 6 : i32
    %28 = vector.broadcast %c6_i32 : i32 to vector<128x192xi32>
    %29 = arith.shrsi %23, %28 : vector<128x192xi32>
    %30 = arith.addi %27, %29 : vector<128x192xi32>
    %c1_i32_15 = arith.constant 1 : i32
    %31 = vector.broadcast %c1_i32_15 : i32 to vector<128x192xi32>
    %32 = arith.subi %30, %31 : vector<128x192xi32>
    %33 = arith.cmpi eq, %22, %32 : vector<128x192xi32>
    %34 = arith.extui %33 : vector<128x192xi1> to vector<128x192xi32>
    %35 = arith.sitofp %34 : vector<128x192xi32> to vector<128x192xf32>
    %cst_16 = arith.constant 0.000000e+00 : f32
    %36 = vector.broadcast %cst_16 : f32 to vector<2x10xf32>
    %c0_17 = arith.constant 0 : index
    %c0_18 = arith.constant 0 : index
    %37 = vector.load %arg11[%c0_17, %c0_18] : memref<1x10xf32, #tpu.memory_space<vmem>>, vector<1x10xf32>
    %38 = vector.broadcast %37 : vector<1x10xf32> to vector<2x10xf32>
    %39 = arith.addf %36, %38 : vector<2x10xf32>
    %c0_i32_19 = arith.constant 0 : i32
    %40 = arith.index_cast %c0_i32_19 : i32 to index
    %c0_20 = arith.constant 0 : index
    %c0_21 = arith.constant 0 : index
    %41 = vector.load %arg9[%40, %c0_20, %c0_21] : memref<8x4x128xf32, #tpu.memory_space<vmem>>, vector<1x4x128xf32>
    %42 = vector.shape_cast %41 : vector<1x4x128xf32> to vector<4x128xf32>
    %43 = vector.extract_strided_slice %42 {offsets = [0, 0], sizes = [1, 128], strides = [1, 1]} : vector<4x128xf32> to vector<1x128xf32>
    %44 = vector.broadcast %43 : vector<1x128xf32> to vector<2x128xf32>
    %45 = arith.mulf %44, %19 : vector<2x128xf32>
    %46 = vector.extract_strided_slice %42 {offsets = [1, 0], sizes = [1, 128], strides = [1, 1]} : vector<4x128xf32> to vector<1x128xf32>
    %47 = vector.broadcast %46 : vector<1x128xf32> to vector<2x128xf32>
    %48 = arith.mulf %47, %20 : vector<2x128xf32>
    %49 = arith.addf %45, %48 : vector<2x128xf32>
    %50 = vector.extract_strided_slice %42 {offsets = [2, 0], sizes = [1, 128], strides = [1, 1]} : vector<4x128xf32> to vector<1x128xf32>
    %51 = vector.broadcast %50 : vector<1x128xf32> to vector<2x128xf32>
    %52 = arith.mulf %51, %21 : vector<2x128xf32>
    %53 = arith.addf %49, %52 : vector<2x128xf32>
    %54 = vector.extract_strided_slice %42 {offsets = [3, 0], sizes = [1, 128], strides = [1, 1]} : vector<4x128xf32> to vector<1x128xf32>
    %55 = vector.broadcast %54 : vector<1x128xf32> to vector<2x128xf32>
    %56 = arith.addf %53, %55 : vector<2x128xf32>
    %cst_22 = arith.constant 0.000000e+00 : f32
    %57 = vector.broadcast %cst_22 : f32 to vector<2x128xf32>
    %58 = arith.maximumf %56, %57 : vector<2x128xf32>
    %cst_23 = arith.constant dense<0.000000e+00> : vector<2x192xf32>
    %59 = tpu.matmul %58, %35, %cst_23 {dimension_numbers = #tpu.dot_dimension_numbers<[1], [0], [0], [1], [0, 0, 1, 1], [], []>} : vector<2x128xf32>, vector<128x192xf32>, vector<2x192xf32> -> vector<2x192xf32>
    %60 = vector.extract_strided_slice %59 {offsets = [0, 0], sizes = [2, 64], strides = [1, 1]} : vector<2x192xf32> to vector<2x64xf32>
    %61 = vector.extract_strided_slice %59 {offsets = [0, 64], sizes = [2, 64], strides = [1, 1]} : vector<2x192xf32> to vector<2x64xf32>
    %62 = arith.maximumf %60, %61 : vector<2x64xf32>
    %63 = vector.extract_strided_slice %59 {offsets = [0, 128], sizes = [2, 64], strides = [1, 1]} : vector<2x192xf32> to vector<2x64xf32>
    %64 = arith.maximumf %62, %63 : vector<2x64xf32>
    %65 = arith.index_cast %c0_i32_19 : i32 to index
    %c0_24 = arith.constant 0 : index
    %c0_25 = arith.constant 0 : index
    %66 = vector.load %arg10[%65, %c0_24, %c0_25] : memref<8x64x10xf32, #tpu.memory_space<vmem>>, vector<1x64x10xf32>
    %67 = vector.shape_cast %66 : vector<1x64x10xf32> to vector<64x10xf32>
    %cst_26 = arith.constant dense<0.000000e+00> : vector<2x10xf32>
    %68 = tpu.matmul %64, %67, %cst_26 {dimension_numbers = #tpu.dot_dimension_numbers<[1], [0], [0], [1], [0, 0, 1, 1], [], []>} : vector<2x64xf32>, vector<64x10xf32>, vector<2x10xf32> -> vector<2x10xf32>
    %69 = arith.addf %39, %68 : vector<2x10xf32>
    %c1_i32_27 = arith.constant 1 : i32
    %70 = arith.index_cast %c1_i32_27 : i32 to index
    %c0_28 = arith.constant 0 : index
    %c0_29 = arith.constant 0 : index
    %71 = vector.load %arg9[%70, %c0_28, %c0_29] : memref<8x4x128xf32, #tpu.memory_space<vmem>>, vector<1x4x128xf32>
    %72 = vector.shape_cast %71 : vector<1x4x128xf32> to vector<4x128xf32>
    %73 = vector.extract_strided_slice %72 {offsets = [0, 0], sizes = [1, 128], strides = [1, 1]} : vector<4x128xf32> to vector<1x128xf32>
    %74 = vector.broadcast %73 : vector<1x128xf32> to vector<2x128xf32>
    %75 = arith.mulf %74, %19 : vector<2x128xf32>
    %76 = vector.extract_strided_slice %72 {offsets = [1, 0], sizes = [1, 128], strides = [1, 1]} : vector<4x128xf32> to vector<1x128xf32>
    %77 = vector.broadcast %76 : vector<1x128xf32> to vector<2x128xf32>
    %78 = arith.mulf %77, %20 : vector<2x128xf32>
    %79 = arith.addf %75, %78 : vector<2x128xf32>
    %80 = vector.extract_strided_slice %72 {offsets = [2, 0], sizes = [1, 128], strides = [1, 1]} : vector<4x128xf32> to vector<1x128xf32>
    %81 = vector.broadcast %80 : vector<1x128xf32> to vector<2x128xf32>
    %82 = arith.mulf %81, %21 : vector<2x128xf32>
    %83 = arith.addf %79, %82 : vector<2x128xf32>
    %84 = vector.extract_strided_slice %72 {offsets = [3, 0], sizes = [1, 128], strides = [1, 1]} : vector<4x128xf32> to vector<1x128xf32>
    %85 = vector.broadcast %84 : vector<1x128xf32> to vector<2x128xf32>
    %86 = arith.addf %83, %85 : vector<2x128xf32>
    %cst_30 = arith.constant 0.000000e+00 : f32
    %87 = vector.broadcast %cst_30 : f32 to vector<2x128xf32>
    %88 = arith.maximumf %86, %87 : vector<2x128xf32>
    %cst_31 = arith.constant dense<0.000000e+00> : vector<2x192xf32>
    %89 = tpu.matmul %88, %35, %cst_31 {dimension_numbers = #tpu.dot_dimension_numbers<[1], [0], [0], [1], [0, 0, 1, 1], [], []>} : vector<2x128xf32>, vector<128x192xf32>, vector<2x192xf32> -> vector<2x192xf32>
    %90 = vector.extract_strided_slice %89 {offsets = [0, 0], sizes = [2, 64], strides = [1, 1]} : vector<2x192xf32> to vector<2x64xf32>
    %91 = vector.extract_strided_slice %89 {offsets = [0, 64], sizes = [2, 64], strides = [1, 1]} : vector<2x192xf32> to vector<2x64xf32>
    %92 = arith.maximumf %90, %91 : vector<2x64xf32>
    %93 = vector.extract_strided_slice %89 {offsets = [0, 128], sizes = [2, 64], strides = [1, 1]} : vector<2x192xf32> to vector<2x64xf32>
    %94 = arith.maximumf %92, %93 : vector<2x64xf32>
    %95 = arith.index_cast %c1_i32_27 : i32 to index
    %c0_32 = arith.constant 0 : index
    %c0_33 = arith.constant 0 : index
    %96 = vector.load %arg10[%95, %c0_32, %c0_33] : memref<8x64x10xf32, #tpu.memory_space<vmem>>, vector<1x64x10xf32>
    %97 = vector.shape_cast %96 : vector<1x64x10xf32> to vector<64x10xf32>
    %cst_34 = arith.constant dense<0.000000e+00> : vector<2x10xf32>
    %98 = tpu.matmul %94, %97, %cst_34 {dimension_numbers = #tpu.dot_dimension_numbers<[1], [0], [0], [1], [0, 0, 1, 1], [], []>} : vector<2x64xf32>, vector<64x10xf32>, vector<2x10xf32> -> vector<2x10xf32>
    %99 = arith.addf %69, %98 : vector<2x10xf32>
    %c2_i32_35 = arith.constant 2 : i32
    %100 = arith.index_cast %c2_i32_35 : i32 to index
    %c0_36 = arith.constant 0 : index
    %c0_37 = arith.constant 0 : index
    %101 = vector.load %arg9[%100, %c0_36, %c0_37] : memref<8x4x128xf32, #tpu.memory_space<vmem>>, vector<1x4x128xf32>
    %102 = vector.shape_cast %101 : vector<1x4x128xf32> to vector<4x128xf32>
    %103 = vector.extract_strided_slice %102 {offsets = [0, 0], sizes = [1, 128], strides = [1, 1]} : vector<4x128xf32> to vector<1x128xf32>
    %104 = vector.broadcast %103 : vector<1x128xf32> to vector<2x128xf32>
    %105 = arith.mulf %104, %19 : vector<2x128xf32>
    %106 = vector.extract_strided_slice %102 {offsets = [1, 0], sizes = [1, 128], strides = [1, 1]} : vector<4x128xf32> to vector<1x128xf32>
    %107 = vector.broadcast %106 : vector<1x128xf32> to vector<2x128xf32>
    %108 = arith.mulf %107, %20 : vector<2x128xf32>
    %109 = arith.addf %105, %108 : vector<2x128xf32>
    %110 = vector.extract_strided_slice %102 {offsets = [2, 0], sizes = [1, 128], strides = [1, 1]} : vector<4x128xf32> to vector<1x128xf32>
    %111 = vector.broadcast %110 : vector<1x128xf32> to vector<2x128xf32>
    %112 = arith.mulf %111, %21 : vector<2x128xf32>
    %113 = arith.addf %109, %112 : vector<2x128xf32>
    %114 = vector.extract_strided_slice %102 {offsets = [3, 0], sizes = [1, 128], strides = [1, 1]} : vector<4x128xf32> to vector<1x128xf32>
    %115 = vector.broadcast %114 : vector<1x128xf32> to vector<2x128xf32>
    %116 = arith.addf %113, %115 : vector<2x128xf32>
    %cst_38 = arith.constant 0.000000e+00 : f32
    %117 = vector.broadcast %cst_38 : f32 to vector<2x128xf32>
    %118 = arith.maximumf %116, %117 : vector<2x128xf32>
    %cst_39 = arith.constant dense<0.000000e+00> : vector<2x192xf32>
    %119 = tpu.matmul %118, %35, %cst_39 {dimension_numbers = #tpu.dot_dimension_numbers<[1], [0], [0], [1], [0, 0, 1, 1], [], []>} : vector<2x128xf32>, vector<128x192xf32>, vector<2x192xf32> -> vector<2x192xf32>
    %120 = vector.extract_strided_slice %119 {offsets = [0, 0], sizes = [2, 64], strides = [1, 1]} : vector<2x192xf32> to vector<2x64xf32>
    %121 = vector.extract_strided_slice %119 {offsets = [0, 64], sizes = [2, 64], strides = [1, 1]} : vector<2x192xf32> to vector<2x64xf32>
    %122 = arith.maximumf %120, %121 : vector<2x64xf32>
    %123 = vector.extract_strided_slice %119 {offsets = [0, 128], sizes = [2, 64], strides = [1, 1]} : vector<2x192xf32> to vector<2x64xf32>
    %124 = arith.maximumf %122, %123 : vector<2x64xf32>
    %125 = arith.index_cast %c2_i32_35 : i32 to index
    %c0_40 = arith.constant 0 : index
    %c0_41 = arith.constant 0 : index
    %126 = vector.load %arg10[%125, %c0_40, %c0_41] : memref<8x64x10xf32, #tpu.memory_space<vmem>>, vector<1x64x10xf32>
    %127 = vector.shape_cast %126 : vector<1x64x10xf32> to vector<64x10xf32>
    %cst_42 = arith.constant dense<0.000000e+00> : vector<2x10xf32>
    %128 = tpu.matmul %124, %127, %cst_42 {dimension_numbers = #tpu.dot_dimension_numbers<[1], [0], [0], [1], [0, 0, 1, 1], [], []>} : vector<2x64xf32>, vector<64x10xf32>, vector<2x10xf32> -> vector<2x10xf32>
    %129 = arith.addf %99, %128 : vector<2x10xf32>
    %c3_i32 = arith.constant 3 : i32
    %130 = arith.index_cast %c3_i32 : i32 to index
    %c0_43 = arith.constant 0 : index
    %c0_44 = arith.constant 0 : index
    %131 = vector.load %arg9[%130, %c0_43, %c0_44] : memref<8x4x128xf32, #tpu.memory_space<vmem>>, vector<1x4x128xf32>
    %132 = vector.shape_cast %131 : vector<1x4x128xf32> to vector<4x128xf32>
    %133 = vector.extract_strided_slice %132 {offsets = [0, 0], sizes = [1, 128], strides = [1, 1]} : vector<4x128xf32> to vector<1x128xf32>
    %134 = vector.broadcast %133 : vector<1x128xf32> to vector<2x128xf32>
    %135 = arith.mulf %134, %19 : vector<2x128xf32>
    %136 = vector.extract_strided_slice %132 {offsets = [1, 0], sizes = [1, 128], strides = [1, 1]} : vector<4x128xf32> to vector<1x128xf32>
    %137 = vector.broadcast %136 : vector<1x128xf32> to vector<2x128xf32>
    %138 = arith.mulf %137, %20 : vector<2x128xf32>
    %139 = arith.addf %135, %138 : vector<2x128xf32>
    %140 = vector.extract_strided_slice %132 {offsets = [2, 0], sizes = [1, 128], strides = [1, 1]} : vector<4x128xf32> to vector<1x128xf32>
    %141 = vector.broadcast %140 : vector<1x128xf32> to vector<2x128xf32>
    %142 = arith.mulf %141, %21 : vector<2x128xf32>
    %143 = arith.addf %139, %142 : vector<2x128xf32>
    %144 = vector.extract_strided_slice %132 {offsets = [3, 0], sizes = [1, 128], strides = [1, 1]} : vector<4x128xf32> to vector<1x128xf32>
    %145 = vector.broadcast %144 : vector<1x128xf32> to vector<2x128xf32>
    %146 = arith.addf %143, %145 : vector<2x128xf32>
    %cst_45 = arith.constant 0.000000e+00 : f32
    %147 = vector.broadcast %cst_45 : f32 to vector<2x128xf32>
    %148 = arith.maximumf %146, %147 : vector<2x128xf32>
    %cst_46 = arith.constant dense<0.000000e+00> : vector<2x192xf32>
    %149 = tpu.matmul %148, %35, %cst_46 {dimension_numbers = #tpu.dot_dimension_numbers<[1], [0], [0], [1], [0, 0, 1, 1], [], []>} : vector<2x128xf32>, vector<128x192xf32>, vector<2x192xf32> -> vector<2x192xf32>
    %150 = vector.extract_strided_slice %149 {offsets = [0, 0], sizes = [2, 64], strides = [1, 1]} : vector<2x192xf32> to vector<2x64xf32>
    %151 = vector.extract_strided_slice %149 {offsets = [0, 64], sizes = [2, 64], strides = [1, 1]} : vector<2x192xf32> to vector<2x64xf32>
    %152 = arith.maximumf %150, %151 : vector<2x64xf32>
    %153 = vector.extract_strided_slice %149 {offsets = [0, 128], sizes = [2, 64], strides = [1, 1]} : vector<2x192xf32> to vector<2x64xf32>
    %154 = arith.maximumf %152, %153 : vector<2x64xf32>
    %155 = arith.index_cast %c3_i32 : i32 to index
    %c0_47 = arith.constant 0 : index
    %c0_48 = arith.constant 0 : index
    %156 = vector.load %arg10[%155, %c0_47, %c0_48] : memref<8x64x10xf32, #tpu.memory_space<vmem>>, vector<1x64x10xf32>
    %157 = vector.shape_cast %156 : vector<1x64x10xf32> to vector<64x10xf32>
    %cst_49 = arith.constant dense<0.000000e+00> : vector<2x10xf32>
    %158 = tpu.matmul %154, %157, %cst_49 {dimension_numbers = #tpu.dot_dimension_numbers<[1], [0], [0], [1], [0, 0, 1, 1], [], []>} : vector<2x64xf32>, vector<64x10xf32>, vector<2x10xf32> -> vector<2x10xf32>
    %159 = arith.addf %129, %158 : vector<2x10xf32>
    %c4_i32 = arith.constant 4 : i32
    %160 = arith.index_cast %c4_i32 : i32 to index
    %c0_50 = arith.constant 0 : index
    %c0_51 = arith.constant 0 : index
    %161 = vector.load %arg9[%160, %c0_50, %c0_51] : memref<8x4x128xf32, #tpu.memory_space<vmem>>, vector<1x4x128xf32>
    %162 = vector.shape_cast %161 : vector<1x4x128xf32> to vector<4x128xf32>
    %163 = vector.extract_strided_slice %162 {offsets = [0, 0], sizes = [1, 128], strides = [1, 1]} : vector<4x128xf32> to vector<1x128xf32>
    %164 = vector.broadcast %163 : vector<1x128xf32> to vector<2x128xf32>
    %165 = arith.mulf %164, %19 : vector<2x128xf32>
    %166 = vector.extract_strided_slice %162 {offsets = [1, 0], sizes = [1, 128], strides = [1, 1]} : vector<4x128xf32> to vector<1x128xf32>
    %167 = vector.broadcast %166 : vector<1x128xf32> to vector<2x128xf32>
    %168 = arith.mulf %167, %20 : vector<2x128xf32>
    %169 = arith.addf %165, %168 : vector<2x128xf32>
    %170 = vector.extract_strided_slice %162 {offsets = [2, 0], sizes = [1, 128], strides = [1, 1]} : vector<4x128xf32> to vector<1x128xf32>
    %171 = vector.broadcast %170 : vector<1x128xf32> to vector<2x128xf32>
    %172 = arith.mulf %171, %21 : vector<2x128xf32>
    %173 = arith.addf %169, %172 : vector<2x128xf32>
    %174 = vector.extract_strided_slice %162 {offsets = [3, 0], sizes = [1, 128], strides = [1, 1]} : vector<4x128xf32> to vector<1x128xf32>
    %175 = vector.broadcast %174 : vector<1x128xf32> to vector<2x128xf32>
    %176 = arith.addf %173, %175 : vector<2x128xf32>
    %cst_52 = arith.constant 0.000000e+00 : f32
    %177 = vector.broadcast %cst_52 : f32 to vector<2x128xf32>
    %178 = arith.maximumf %176, %177 : vector<2x128xf32>
    %cst_53 = arith.constant dense<0.000000e+00> : vector<2x192xf32>
    %179 = tpu.matmul %178, %35, %cst_53 {dimension_numbers = #tpu.dot_dimension_numbers<[1], [0], [0], [1], [0, 0, 1, 1], [], []>} : vector<2x128xf32>, vector<128x192xf32>, vector<2x192xf32> -> vector<2x192xf32>
    %180 = vector.extract_strided_slice %179 {offsets = [0, 0], sizes = [2, 64], strides = [1, 1]} : vector<2x192xf32> to vector<2x64xf32>
    %181 = vector.extract_strided_slice %179 {offsets = [0, 64], sizes = [2, 64], strides = [1, 1]} : vector<2x192xf32> to vector<2x64xf32>
    %182 = arith.maximumf %180, %181 : vector<2x64xf32>
    %183 = vector.extract_strided_slice %179 {offsets = [0, 128], sizes = [2, 64], strides = [1, 1]} : vector<2x192xf32> to vector<2x64xf32>
    %184 = arith.maximumf %182, %183 : vector<2x64xf32>
    %185 = arith.index_cast %c4_i32 : i32 to index
    %c0_54 = arith.constant 0 : index
    %c0_55 = arith.constant 0 : index
    %186 = vector.load %arg10[%185, %c0_54, %c0_55] : memref<8x64x10xf32, #tpu.memory_space<vmem>>, vector<1x64x10xf32>
    %187 = vector.shape_cast %186 : vector<1x64x10xf32> to vector<64x10xf32>
    %cst_56 = arith.constant dense<0.000000e+00> : vector<2x10xf32>
    %188 = tpu.matmul %184, %187, %cst_56 {dimension_numbers = #tpu.dot_dimension_numbers<[1], [0], [0], [1], [0, 0, 1, 1], [], []>} : vector<2x64xf32>, vector<64x10xf32>, vector<2x10xf32> -> vector<2x10xf32>
    %189 = arith.addf %159, %188 : vector<2x10xf32>
    %c5_i32 = arith.constant 5 : i32
    %190 = arith.index_cast %c5_i32 : i32 to index
    %c0_57 = arith.constant 0 : index
    %c0_58 = arith.constant 0 : index
    %191 = vector.load %arg9[%190, %c0_57, %c0_58] : memref<8x4x128xf32, #tpu.memory_space<vmem>>, vector<1x4x128xf32>
    %192 = vector.shape_cast %191 : vector<1x4x128xf32> to vector<4x128xf32>
    %193 = vector.extract_strided_slice %192 {offsets = [0, 0], sizes = [1, 128], strides = [1, 1]} : vector<4x128xf32> to vector<1x128xf32>
    %194 = vector.broadcast %193 : vector<1x128xf32> to vector<2x128xf32>
    %195 = arith.mulf %194, %19 : vector<2x128xf32>
    %196 = vector.extract_strided_slice %192 {offsets = [1, 0], sizes = [1, 128], strides = [1, 1]} : vector<4x128xf32> to vector<1x128xf32>
    %197 = vector.broadcast %196 : vector<1x128xf32> to vector<2x128xf32>
    %198 = arith.mulf %197, %20 : vector<2x128xf32>
    %199 = arith.addf %195, %198 : vector<2x128xf32>
    %200 = vector.extract_strided_slice %192 {offsets = [2, 0], sizes = [1, 128], strides = [1, 1]} : vector<4x128xf32> to vector<1x128xf32>
    %201 = vector.broadcast %200 : vector<1x128xf32> to vector<2x128xf32>
    %202 = arith.mulf %201, %21 : vector<2x128xf32>
    %203 = arith.addf %199, %202 : vector<2x128xf32>
    %204 = vector.extract_strided_slice %192 {offsets = [3, 0], sizes = [1, 128], strides = [1, 1]} : vector<4x128xf32> to vector<1x128xf32>
    %205 = vector.broadcast %204 : vector<1x128xf32> to vector<2x128xf32>
    %206 = arith.addf %203, %205 : vector<2x128xf32>
    %cst_59 = arith.constant 0.000000e+00 : f32
    %207 = vector.broadcast %cst_59 : f32 to vector<2x128xf32>
    %208 = arith.maximumf %206, %207 : vector<2x128xf32>
    %cst_60 = arith.constant dense<0.000000e+00> : vector<2x192xf32>
    %209 = tpu.matmul %208, %35, %cst_60 {dimension_numbers = #tpu.dot_dimension_numbers<[1], [0], [0], [1], [0, 0, 1, 1], [], []>} : vector<2x128xf32>, vector<128x192xf32>, vector<2x192xf32> -> vector<2x192xf32>
    %210 = vector.extract_strided_slice %209 {offsets = [0, 0], sizes = [2, 64], strides = [1, 1]} : vector<2x192xf32> to vector<2x64xf32>
    %211 = vector.extract_strided_slice %209 {offsets = [0, 64], sizes = [2, 64], strides = [1, 1]} : vector<2x192xf32> to vector<2x64xf32>
    %212 = arith.maximumf %210, %211 : vector<2x64xf32>
    %213 = vector.extract_strided_slice %209 {offsets = [0, 128], sizes = [2, 64], strides = [1, 1]} : vector<2x192xf32> to vector<2x64xf32>
    %214 = arith.maximumf %212, %213 : vector<2x64xf32>
    %215 = arith.index_cast %c5_i32 : i32 to index
    %c0_61 = arith.constant 0 : index
    %c0_62 = arith.constant 0 : index
    %216 = vector.load %arg10[%215, %c0_61, %c0_62] : memref<8x64x10xf32, #tpu.memory_space<vmem>>, vector<1x64x10xf32>
    %217 = vector.shape_cast %216 : vector<1x64x10xf32> to vector<64x10xf32>
    %cst_63 = arith.constant dense<0.000000e+00> : vector<2x10xf32>
    %218 = tpu.matmul %214, %217, %cst_63 {dimension_numbers = #tpu.dot_dimension_numbers<[1], [0], [0], [1], [0, 0, 1, 1], [], []>} : vector<2x64xf32>, vector<64x10xf32>, vector<2x10xf32> -> vector<2x10xf32>
    %219 = arith.addf %189, %218 : vector<2x10xf32>
    %c6_i32_64 = arith.constant 6 : i32
    %220 = arith.index_cast %c6_i32_64 : i32 to index
    %c0_65 = arith.constant 0 : index
    %c0_66 = arith.constant 0 : index
    %221 = vector.load %arg9[%220, %c0_65, %c0_66] : memref<8x4x128xf32, #tpu.memory_space<vmem>>, vector<1x4x128xf32>
    %222 = vector.shape_cast %221 : vector<1x4x128xf32> to vector<4x128xf32>
    %223 = vector.extract_strided_slice %222 {offsets = [0, 0], sizes = [1, 128], strides = [1, 1]} : vector<4x128xf32> to vector<1x128xf32>
    %224 = vector.broadcast %223 : vector<1x128xf32> to vector<2x128xf32>
    %225 = arith.mulf %224, %19 : vector<2x128xf32>
    %226 = vector.extract_strided_slice %222 {offsets = [1, 0], sizes = [1, 128], strides = [1, 1]} : vector<4x128xf32> to vector<1x128xf32>
    %227 = vector.broadcast %226 : vector<1x128xf32> to vector<2x128xf32>
    %228 = arith.mulf %227, %20 : vector<2x128xf32>
    %229 = arith.addf %225, %228 : vector<2x128xf32>
    %230 = vector.extract_strided_slice %222 {offsets = [2, 0], sizes = [1, 128], strides = [1, 1]} : vector<4x128xf32> to vector<1x128xf32>
    %231 = vector.broadcast %230 : vector<1x128xf32> to vector<2x128xf32>
    %232 = arith.mulf %231, %21 : vector<2x128xf32>
    %233 = arith.addf %229, %232 : vector<2x128xf32>
    %234 = vector.extract_strided_slice %222 {offsets = [3, 0], sizes = [1, 128], strides = [1, 1]} : vector<4x128xf32> to vector<1x128xf32>
    %235 = vector.broadcast %234 : vector<1x128xf32> to vector<2x128xf32>
    %236 = arith.addf %233, %235 : vector<2x128xf32>
    %cst_67 = arith.constant 0.000000e+00 : f32
    %237 = vector.broadcast %cst_67 : f32 to vector<2x128xf32>
    %238 = arith.maximumf %236, %237 : vector<2x128xf32>
    %cst_68 = arith.constant dense<0.000000e+00> : vector<2x192xf32>
    %239 = tpu.matmul %238, %35, %cst_68 {dimension_numbers = #tpu.dot_dimension_numbers<[1], [0], [0], [1], [0, 0, 1, 1], [], []>} : vector<2x128xf32>, vector<128x192xf32>, vector<2x192xf32> -> vector<2x192xf32>
    %240 = vector.extract_strided_slice %239 {offsets = [0, 0], sizes = [2, 64], strides = [1, 1]} : vector<2x192xf32> to vector<2x64xf32>
    %241 = vector.extract_strided_slice %239 {offsets = [0, 64], sizes = [2, 64], strides = [1, 1]} : vector<2x192xf32> to vector<2x64xf32>
    %242 = arith.maximumf %240, %241 : vector<2x64xf32>
    %243 = vector.extract_strided_slice %239 {offsets = [0, 128], sizes = [2, 64], strides = [1, 1]} : vector<2x192xf32> to vector<2x64xf32>
    %244 = arith.maximumf %242, %243 : vector<2x64xf32>
    %245 = arith.index_cast %c6_i32_64 : i32 to index
    %c0_69 = arith.constant 0 : index
    %c0_70 = arith.constant 0 : index
    %246 = vector.load %arg10[%245, %c0_69, %c0_70] : memref<8x64x10xf32, #tpu.memory_space<vmem>>, vector<1x64x10xf32>
    %247 = vector.shape_cast %246 : vector<1x64x10xf32> to vector<64x10xf32>
    %cst_71 = arith.constant dense<0.000000e+00> : vector<2x10xf32>
    %248 = tpu.matmul %244, %247, %cst_71 {dimension_numbers = #tpu.dot_dimension_numbers<[1], [0], [0], [1], [0, 0, 1, 1], [], []>} : vector<2x64xf32>, vector<64x10xf32>, vector<2x10xf32> -> vector<2x10xf32>
    %249 = arith.addf %219, %248 : vector<2x10xf32>
    %c7_i32 = arith.constant 7 : i32
    %250 = arith.index_cast %c7_i32 : i32 to index
    %c0_72 = arith.constant 0 : index
    %c0_73 = arith.constant 0 : index
    %251 = vector.load %arg9[%250, %c0_72, %c0_73] : memref<8x4x128xf32, #tpu.memory_space<vmem>>, vector<1x4x128xf32>
    %252 = vector.shape_cast %251 : vector<1x4x128xf32> to vector<4x128xf32>
    %253 = vector.extract_strided_slice %252 {offsets = [0, 0], sizes = [1, 128], strides = [1, 1]} : vector<4x128xf32> to vector<1x128xf32>
    %254 = vector.broadcast %253 : vector<1x128xf32> to vector<2x128xf32>
    %255 = arith.mulf %254, %19 : vector<2x128xf32>
    %256 = vector.extract_strided_slice %252 {offsets = [1, 0], sizes = [1, 128], strides = [1, 1]} : vector<4x128xf32> to vector<1x128xf32>
    %257 = vector.broadcast %256 : vector<1x128xf32> to vector<2x128xf32>
    %258 = arith.mulf %257, %20 : vector<2x128xf32>
    %259 = arith.addf %255, %258 : vector<2x128xf32>
    %260 = vector.extract_strided_slice %252 {offsets = [2, 0], sizes = [1, 128], strides = [1, 1]} : vector<4x128xf32> to vector<1x128xf32>
    %261 = vector.broadcast %260 : vector<1x128xf32> to vector<2x128xf32>
    %262 = arith.mulf %261, %21 : vector<2x128xf32>
    %263 = arith.addf %259, %262 : vector<2x128xf32>
    %264 = vector.extract_strided_slice %252 {offsets = [3, 0], sizes = [1, 128], strides = [1, 1]} : vector<4x128xf32> to vector<1x128xf32>
    %265 = vector.broadcast %264 : vector<1x128xf32> to vector<2x128xf32>
    %266 = arith.addf %263, %265 : vector<2x128xf32>
    %cst_74 = arith.constant 0.000000e+00 : f32
    %267 = vector.broadcast %cst_74 : f32 to vector<2x128xf32>
    %268 = arith.maximumf %266, %267 : vector<2x128xf32>
    %cst_75 = arith.constant dense<0.000000e+00> : vector<2x192xf32>
    %269 = tpu.matmul %268, %35, %cst_75 {dimension_numbers = #tpu.dot_dimension_numbers<[1], [0], [0], [1], [0, 0, 1, 1], [], []>} : vector<2x128xf32>, vector<128x192xf32>, vector<2x192xf32> -> vector<2x192xf32>
    %270 = vector.extract_strided_slice %269 {offsets = [0, 0], sizes = [2, 64], strides = [1, 1]} : vector<2x192xf32> to vector<2x64xf32>
    %271 = vector.extract_strided_slice %269 {offsets = [0, 64], sizes = [2, 64], strides = [1, 1]} : vector<2x192xf32> to vector<2x64xf32>
    %272 = arith.maximumf %270, %271 : vector<2x64xf32>
    %273 = vector.extract_strided_slice %269 {offsets = [0, 128], sizes = [2, 64], strides = [1, 1]} : vector<2x192xf32> to vector<2x64xf32>
    %274 = arith.maximumf %272, %273 : vector<2x64xf32>
    %275 = arith.index_cast %c7_i32 : i32 to index
    %c0_76 = arith.constant 0 : index
    %c0_77 = arith.constant 0 : index
    %276 = vector.load %arg10[%275, %c0_76, %c0_77] : memref<8x64x10xf32, #tpu.memory_space<vmem>>, vector<1x64x10xf32>
    %277 = vector.shape_cast %276 : vector<1x64x10xf32> to vector<64x10xf32>
    %cst_78 = arith.constant dense<0.000000e+00> : vector<2x10xf32>
    %278 = tpu.matmul %274, %277, %cst_78 {dimension_numbers = #tpu.dot_dimension_numbers<[1], [0], [0], [1], [0, 0, 1, 1], [], []>} : vector<2x64xf32>, vector<64x10xf32>, vector<2x10xf32> -> vector<2x10xf32>
    %279 = arith.addf %249, %278 : vector<2x10xf32>
    %c8_i32_79 = arith.constant 8 : i32
    %c0_80 = arith.constant 0 : index
    %c0_81 = arith.constant 0 : index
    %280 = vector.load %arg12[%c0_80, %c0_81] : memref<2x10xf32, #tpu.memory_space<vmem>>, vector<2x10xf32>
    tpu.vector_store %arg12[%c0_80, %c0_81], %279 {strides = array<i32>} : memref<2x10xf32, #tpu.memory_space<vmem>>, vector<2x10xf32>,
    return
  }
  func.func @transform_0(%arg0: i32) -> (i32, i32, i32) {
    %c0_i32 = arith.constant 0 : i32
    %c0_i32_0 = arith.constant 0 : i32
    %c0_i32_1 = arith.constant 0 : i32
    return %c0_i32, %arg0, %c0_i32_0 : i32, i32, i32
  }
  func.func @transform_1(%arg0: i32) -> (i32, i32) {
    %c0_i32 = arith.constant 0 : i32
    %c0_i32_0 = arith.constant 0 : i32
    %c0_i32_1 = arith.constant 0 : i32
    return %c0_i32, %c0_i32_0 : i32, i32
  }
  func.func @transform_2(%arg0: i32) -> (i32, i32) {
    %c0_i32 = arith.constant 0 : i32
    %c0_i32_0 = arith.constant 0 : i32
    %c0_i32_1 = arith.constant 0 : i32
    return %c0_i32, %c0_i32_0 : i32, i32
  }
  func.func @transform_3(%arg0: i32) -> (i32, i32) {
    %c0_i32 = arith.constant 0 : i32
    %c0_i32_0 = arith.constant 0 : i32
    %c0_i32_1 = arith.constant 0 : i32
    return %c0_i32, %c0_i32_0 : i32, i32
  }
  func.func @transform_4(%arg0: i32) -> (i32, i32) {
    %c0_i32 = arith.constant 0 : i32
    %c0_i32_0 = arith.constant 0 : i32
    %c0_i32_1 = arith.constant 0 : i32
    return %c0_i32, %c0_i32_0 : i32, i32
  }
  func.func @transform_5(%arg0: i32) -> (i32, i32) {
    %c0_i32 = arith.constant 0 : i32
    %c0_i32_0 = arith.constant 0 : i32
    %c0_i32_1 = arith.constant 0 : i32
    return %c0_i32, %c0_i32_0 : i32, i32
  }
  func.func @transform_6(%arg0: i32) -> (i32, i32) {
    %c0_i32 = arith.constant 0 : i32
    %c0_i32_0 = arith.constant 0 : i32
    %c0_i32_1 = arith.constant 0 : i32
    return %c0_i32, %c0_i32_0 : i32, i32
  }
  func.func @transform_7(%arg0: i32) -> (i32, i32) {
    %c0_i32 = arith.constant 0 : i32
    %c0_i32_0 = arith.constant 0 : i32
    %c0_i32_1 = arith.constant 0 : i32
    return %c0_i32, %c0_i32_0 : i32, i32
  }
  func.func @transform_8(%arg0: i32) -> (i32, i32, i32) {
    %c0_i32 = arith.constant 0 : i32
    %c0_i32_0 = arith.constant 0 : i32
    %c0_i32_1 = arith.constant 0 : i32
    %c0_i32_2 = arith.constant 0 : i32
    return %c0_i32, %c0_i32_0, %c0_i32_1 : i32, i32, i32
  }
  func.func @transform_9(%arg0: i32) -> (i32, i32, i32) {
    %c0_i32 = arith.constant 0 : i32
    %c0_i32_0 = arith.constant 0 : i32
    %c0_i32_1 = arith.constant 0 : i32
    %c0_i32_2 = arith.constant 0 : i32
    return %c0_i32, %c0_i32_0, %c0_i32_1 : i32, i32, i32
  }
  func.func @transform_10(%arg0: i32) -> (i32, i32) {
    %c0_i32 = arith.constant 0 : i32
    %c0_i32_0 = arith.constant 0 : i32
    %c0_i32_1 = arith.constant 0 : i32
    return %c0_i32, %c0_i32_0 : i32, i32
  }
  func.func @transform_11(%arg0: i32) -> (i32, i32) {
    %c0_i32 = arith.constant 0 : i32
    %c0_i32_0 = arith.constant 0 : i32
    return %arg0, %c0_i32 : i32, i32
  }
}

</mosaic_0001>

<llo_original>
// kernel: neural_network_forward.1
$region0: #{neural_network_forward.1}
  #allocation0 [shape = 'u32[]', space=smem, size = 0x4, offset = 0x4, fixed_abs, tag = 'smem constant byte address 0x4 - core index']
  #allocation1 [shape = 'u32[72,128]{1,0:T(1,128)}', space=vmem, size = 0x9000, scoped, tag = 'internal scratch']
  #allocation2 [shape = 'f32[8,2,256]{2,1,0:T(2,128)}', space=vmem, size = 0x4000, scoped, tag = 'scratch operand']
  %s0 = inlined_call_operand.vmem [shape: bf16[8,2,32], index: 0, kind: input, shape index: {}]
  %s1 = inlined_call_operand.vmem [shape: bf16[32,256], index: 1, kind: input, shape index: {}]
  %s2 = inlined_call_operand.vmem [shape: bf16[64,256], index: 2, kind: input, shape index: {}]
  %s3 = inlined_call_operand.vmem [shape: f32[1,256], index: 3, kind: input, shape index: {}]
  %s4 = inlined_call_operand.vmem [shape: bf16[64,384], index: 4, kind: input, shape index: {}]
  %s5 = inlined_call_operand.vmem [shape: f32[1,384], index: 5, kind: input, shape index: {}]
  %s6 = inlined_call_operand.vmem [shape: f32[1,384], index: 6, kind: input, shape index: {}]
  %s7 = inlined_call_operand.vmem [shape: f32[1,384], index: 7, kind: input, shape index: {}]
  %s8 = inlined_call_operand.vmem [shape: f32[8,4,128], index: 8, kind: input, shape index: {}]
  %s9 = inlined_call_operand.vmem [shape: f32[8,64,10], index: 9, kind: input, shape index: {}]
  %s10 = inlined_call_operand.vmem [shape: f32[1,10], index: 10, kind: input, shape index: {}]
  %s11 = inlined_call_operand.hbm [shape: f32[2,10], index: 11, kind: output, shape index: {}]
  %s12 = sld [smem:[#allocation0]]
  $region68: #{neural_network_forward.1} parent=0
    _
  %s14 = ssub.s32 1, %s12
  %s15 = scalar_select 0, %s14, %s12
  $region1: #{neural_network_forward.1} parent=0
    #allocation3 [shape = 'u8[1024]{0}', space=vmem, size = 0x400, scoped, tag = 'output window, operand 0, single buffered']
    #allocation4 [shape = 's32[1]{0}', space=sflag, size = 0x4, scoped, tag = 'scoped memory for neural_network_forward.1']
    %16 = vsyncpa [#allocation4], 0
    // Predicated region
    $region2: #{neural_network_forward.1} parent=1 // pred_check
      _
    $region3: #{neural_network_forward.1} parent=1 // pred_check_branch
      %18 = sbr.rel (0) target = $region5
    $region4: #{neural_network_forward.1} parent=1 // pred_region
      _
    $region5: #{neural_network_forward.1} parent=1 // pred_fallthru
      _
    // Predicated region
    $region6: #{neural_network_forward.1} parent=1 // pred_check
      _
    $region7: #{neural_network_forward.1} parent=1 // pred_check_branch
      %20 = sbr.rel (0) target = $region9
    $region8: #{neural_network_forward.1} parent=1 // pred_region
      _
    $region9: #{neural_network_forward.1} parent=1 // pred_fallthru
      _
    // Predicated region
    $region10: #{neural_network_forward.1} parent=1 // pred_check
      _
    $region11: #{neural_network_forward.1} parent=1 // pred_check_branch
      %22 = sbr.rel (0) target = $region13
    $region12: #{neural_network_forward.1} parent=1 // pred_region
      _
    $region13: #{neural_network_forward.1} parent=1 // pred_fallthru
      _
    // Predicated region
    $region14: #{neural_network_forward.1} parent=1 // pred_check
      _
    $region15: #{neural_network_forward.1} parent=1 // pred_check_branch
      %24 = sbr.rel (0) target = $region17
    $region16: #{neural_network_forward.1} parent=1 // pred_region
      _
    $region17: #{neural_network_forward.1} parent=1 // pred_fallthru
      _
    // Predicated region
    $region18: #{neural_network_forward.1} parent=1 // pred_check
      _
    $region19: #{neural_network_forward.1} parent=1 // pred_check_branch
      %26 = sbr.rel (0) target = $region21
    $region20: #{neural_network_forward.1} parent=1 // pred_region
      _
    $region21: #{neural_network_forward.1} parent=1 // pred_fallthru
      _
    // Predicated region
    $region22: #{neural_network_forward.1} parent=1 // pred_check
      _
    $region23: #{neural_network_forward.1} parent=1 // pred_check_branch
      %28 = sbr.rel (0) target = $region25
    $region24: #{neural_network_forward.1} parent=1 // pred_region
      _
    $region25: #{neural_network_forward.1} parent=1 // pred_fallthru
      _
    // Predicated region
    $region26: #{neural_network_forward.1} parent=1 // pred_check
      _
    $region27: #{neural_network_forward.1} parent=1 // pred_check_branch
      %30 = sbr.rel (0) target = $region29
    $region28: #{neural_network_forward.1} parent=1 // pred_region
      _
    $region29: #{neural_network_forward.1} parent=1 // pred_fallthru
      _
    // Predicated region
    $region30: #{neural_network_forward.1} parent=1 // pred_check
      _
    $region31: #{neural_network_forward.1} parent=1 // pred_check_branch
      %32 = sbr.rel (0) target = $region33
    $region32: #{neural_network_forward.1} parent=1 // pred_region
      _
    $region33: #{neural_network_forward.1} parent=1 // pred_fallthru
      _
    // Predicated region
    $region34: #{neural_network_forward.1} parent=1 // pred_check
      _
    $region35: #{neural_network_forward.1} parent=1 // pred_check_branch
      %34 = sbr.rel (0) target = $region37
    $region36: #{neural_network_forward.1} parent=1 // pred_region
      _
    $region37: #{neural_network_forward.1} parent=1 // pred_fallthru
      _
    // Predicated region
    $region38: #{neural_network_forward.1} parent=1 // pred_check
      _
    $region39: #{neural_network_forward.1} parent=1 // pred_check_branch
      %36 = sbr.rel (0) target = $region41
    $region40: #{neural_network_forward.1} parent=1 // pred_region
      _
    $region41: #{neural_network_forward.1} parent=1 // pred_fallthru
      _
    // Predicated region
    $region42: #{neural_network_forward.1} parent=1 // pred_check
      _
    $region43: #{neural_network_forward.1} parent=1 // pred_check_branch
      %38 = sbr.rel (0) target = $region45
    $region44: #{neural_network_forward.1} parent=1 // pred_region
      _
    $region45: #{neural_network_forward.1} parent=1 // pred_fallthru
      _
    loop: start=0, step=1, limit=8
    $region46: #{neural_network_forward.1} parent=1 // loop_pre_header
      _
    $region47: #{neural_network_forward.1} parent=1 // loop_header
      %s41 = sphi 0, %s45
      %p42 = scmp.ge.s32.totalorder %s41, 8
    $region48: #{neural_network_forward.1} parent=1 // loop_header_branch
      %44 = sbr.rel (%p42) target = $region52
    $region49: #{neural_network_forward.1} parent=1 // loop_body
      %s46 = scalar_lea.vmem %s0, %s41
      %v47 = vld [vmem:[%s46] sm:$0x1]
      %v48 = vld [vmem:[%s1] sm:$0xff]
      %v49 = vld [vmem:[%s1 + $0x8] sm:$0xff]
      %v50 = vld [vmem:[%s1 + $0x10] sm:$0xff]
      %v51 = vld [vmem:[%s1 + $0x18] sm:$0xff]
      %v52 = vld [vmem:[%s3] sm:$0x3]
      %v54 = vperm.slane %v52, 0
      %v55 = vperm.slane %v52, 1
      %v62 = vunpack.c.l.b16 %v48
      %v63 = vunpack.c.h.b16 %v48
      %v64 = vunpack.c.l.b16 %v49
      %v65 = vunpack.c.h.b16 %v49
      %v66 = vunpack.c.l.b16 %v50
      %v67 = vunpack.c.h.b16 %v50
      %v68 = vunpack.c.l.b16 %v51
      %v69 = vunpack.c.h.b16 %v51
      %v70 = vpack.c.b16 %v64, %v62
      %v71 = vpack.c.b16 %v65, %v63
      %v72 = vpack.c.b16 %v68, %v66
      %v73 = vpack.c.b16 %v69, %v67
      %vm78 = vcmask 261120
      %v80 = vsel %vm78, %v47, 0
      %82 = vmatpush.bf16.msra.mxu0 0
      %83 = vmatpush.bf16.msra.mxu0 0
      %84 = vmatpush.bf16.msra.mxu0 0
      %85 = vmatpush.bf16.msra.mxu0 0
      %86 = vmatpush.bf16.msra.mxu0 0
      %87 = vmatpush.bf16.msra.mxu0 0
      %88 = vmatpush.bf16.msra.mxu0 %v72
      %89 = vmatpush.bf16.msra.mxu0 %v70
      %90 = vmatmul.bf16.gmra.mxu0 %v80
      %v91 = vpop.f32.mrf.mxu0
      %v92 = vadd.f32 %v54, %v91
      %v93 = vpop.f32.mrf.mxu0
      %94 = vdwg.mxu0
      %95 = vmatpush.bf16.msra.mxu0 0
      %96 = vmatpush.bf16.msra.mxu0 0
      %97 = vmatpush.bf16.msra.mxu0 0
      %98 = vmatpush.bf16.msra.mxu0 0
      %99 = vmatpush.bf16.msra.mxu0 0
      %100 = vmatpush.bf16.msra.mxu0 0
      %101 = vmatpush.bf16.msra.mxu0 %v73
      %102 = vmatpush.bf16.msra.mxu0 %v71
      %103 = vmatmul.bf16.gmra.mxu0 %v80
      %v104 = vpop.f32.mrf.mxu0
      %v105 = vadd.f32 %v55, %v104
      %v106 = vpop.f32.mrf.mxu0
      %107 = vdwg.mxu0
      %v110 = vrot.slane %v105, 6
      %vm111 = vcmask 1041408
      %v112 = vsel %vm111, %v92, %v110
      %s114 = smul.u32 %s41, 2
      %s115 = smul.addr %s114, 2
      %s116 = scalar_lea.vmem [#allocation2], %s115
      %117 = vst [vmem:[%s116] sm:$0xf] %v112
    $region50: #{neural_network_forward.1} parent=1 // loop_footer
      %s45 = sadd.s32 1, %s41
    $region51: #{neural_network_forward.1} parent=1 // loop_footer_branch
      %40 = sbr.rel target = $region47
    $region52: #{neural_network_forward.1} parent=1 // loop_exit
      _
    loop: start=0, step=1, limit=8
    $region53: #{neural_network_forward.1} parent=1 // loop_pre_header
      _
    $region54: #{neural_network_forward.1} parent=1 // loop_header
      %s119 = sphi 0, %s123
      %p120 = scmp.ge.s32.totalorder %s119, 8
      %v124 = vphi 0.0, %v274
      %v125 = vphi 0.0, %v268
    $region55: #{neural_network_forward.1} parent=1 // loop_header_branch
      %122 = sbr.rel (%p120) target = $region59
    $region56: #{neural_network_forward.1} parent=1 // loop_body
      %s126 = smul.u32 %s119, 2
      %s127 = smul.addr %s126, 2
      %s128 = scalar_lea.vmem [#allocation2], %s127
      %v129 = vld [vmem:[%s128] sm:$0xf]
      %v130 = vpack.c.bf16 %v124, %v124
      %v131 = vld [vmem:[%s2] sm:$0xff]
      %v132 = vld [vmem:[%s2 + $0x8] sm:$0xff]
      %v133 = vld [vmem:[%s2 + $0x10] sm:$0xff]
      %v134 = vld [vmem:[%s2 + $0x18] sm:$0xff]
      %v135 = vld [vmem:[%s2 + $0x20] sm:$0xff]
      %v136 = vld [vmem:[%s2 + $0x28] sm:$0xff]
      %v137 = vld [vmem:[%s2 + $0x30] sm:$0xff]
      %v138 = vld [vmem:[%s2 + $0x38] sm:$0xff]
      %v147 = vunpack.c.l.b16 %v131
      %v148 = vunpack.c.h.b16 %v131
      %v149 = vunpack.c.l.b16 %v132
      %v150 = vunpack.c.h.b16 %v132
      %v151 = vunpack.c.l.b16 %v133
      %v152 = vunpack.c.h.b16 %v133
      %v153 = vunpack.c.l.b16 %v134
      %v154 = vunpack.c.h.b16 %v134
      %v155 = vunpack.c.l.b16 %v135
      %v156 = vunpack.c.h.b16 %v135
      %v157 = vunpack.c.l.b16 %v136
      %v158 = vunpack.c.h.b16 %v136
      %v159 = vunpack.c.l.b16 %v137
      %v160 = vunpack.c.h.b16 %v137
      %v161 = vunpack.c.l.b16 %v138
      %v162 = vunpack.c.h.b16 %v138
      %v163 = vpack.c.b16 %v149, %v147
      %v164 = vpack.c.b16 %v150, %v148
      %v165 = vpack.c.b16 %v153, %v151
      %v166 = vpack.c.b16 %v154, %v152
      %v167 = vpack.c.b16 %v157, %v155
      %v168 = vpack.c.b16 %v158, %v156
      %v169 = vpack.c.b16 %v161, %v159
      %v170 = vpack.c.b16 %v162, %v160
      %vm179 = vcmask 523264
      %v181 = vsel %vm179, %v130, 0
      %183 = vmatpush.bf16.msra.mxu0 0
      %184 = vmatpush.bf16.msra.mxu0 0
      %185 = vmatpush.bf16.msra.mxu0 0
      %186 = vmatpush.bf16.msra.mxu0 0
      %187 = vmatpush.bf16.msra.mxu0 %v169
      %188 = vmatpush.bf16.msra.mxu0 %v167
      %189 = vmatpush.bf16.msra.mxu0 %v165
      %190 = vmatpush.bf16.msra.mxu0 %v163
      %191 = vmatmul.bf16.gmra.mxu0 %v181
      %v192 = vpop.f32.mrf.mxu0
      %v193 = vadd.f32 0.0, %v192
      %v194 = vpop.f32.mrf.mxu0
      %195 = vdwg.mxu0
      %196 = vmatpush.bf16.msra.mxu0 0
      %197 = vmatpush.bf16.msra.mxu0 0
      %198 = vmatpush.bf16.msra.mxu0 0
      %199 = vmatpush.bf16.msra.mxu0 0
      %200 = vmatpush.bf16.msra.mxu0 %v170
      %201 = vmatpush.bf16.msra.mxu0 %v168
      %202 = vmatpush.bf16.msra.mxu0 %v166
      %203 = vmatpush.bf16.msra.mxu0 %v164
      %204 = vmatmul.bf16.gmra.mxu0 %v181
      %v205 = vpop.f32.mrf.mxu0
      %v206 = vadd.f32 0.0, %v205
      %v207 = vpop.f32.mrf.mxu0
      %208 = vdwg.mxu0
      %v211 = vrot.slane %v206, 6
      %vm212 = vcmask 1041408
      %v213 = vsel %vm212, %v193, %v211
      %v215 = vadd.f32 %v129, %v213
      %v216 = vxor.u32 %v215, 2147483648
      %v217 = vmul.f32 %v216, 1.442695
      %v218 = vpow.pop %v217
      %v219 = vadd.f32 %v218, 1.0
      %v220 = vrcp.pop %v219
      %v221 = vmul.f32 %v219, %v220
      %v222 = vsub.f32 1.0, %v221
      %v223 = vmul.f32 %v220, %v222
      %v224 = vadd.f32 %v220, %v223
      %vm225 = vweird.f32 %v219
      %vm226 = vweird.f32 %v220
      %vm227 = vmor %vm225, %vm226
      %v228 = vsel %vm227, %v220, %v224
      %v229 = vand.u32 2147483647, %v219
      %vm230 = vcmp.eq.f32.partialorder %v229, 8.507059e+37
      %v231 = vand.u32 %v219, 2147483648
      %v232 = vor.u32 1.1754944e-38, %v231
      %v233 = vsel %vm230, %v232, %v228
      %v234 = vmul.f32 1.0, %v233
      %v236 = vrot.slane %v215, 2
      %v238 = vtanh.pop %v236
      %239 = vrot.lane.b32.xlu0 %v215, 64
      %v240 = vpop.permute.xlu0 %239
      %v241 = vrot.slane %v240, 2
      %v243 = vxor.u32 %v241, 2147483648
      %v244 = vmul.f32 %v243, 1.442695
      %v245 = vpow.pop %v244
      %v246 = vadd.f32 %v245, 1.0
      %v247 = vrcp.pop %v246
      %v248 = vmul.f32 %v246, %v247
      %v249 = vsub.f32 1.0, %v248
      %v250 = vmul.f32 %v247, %v249
      %v251 = vadd.f32 %v247, %v250
      %vm252 = vweird.f32 %v246
      %vm253 = vweird.f32 %v247
      %vm254 = vmor %vm252, %vm253
      %v255 = vsel %vm254, %v247, %v251
      %v256 = vand.u32 2147483647, %v246
      %vm257 = vcmp.eq.f32.partialorder %v256, 8.507059e+37
      %v258 = vand.u32 %v246, 2147483648
      %v259 = vor.u32 1.1754944e-38, %v258
      %v260 = vsel %vm257, %v259, %v255
      %v261 = vmul.f32 1.0, %v260
      %v262 = vmul.f32 %v234, %v125
      %v263 = vmul.f32 %v234, %v238
      %265 = vrot.lane.b32.xlu0 %v263, 64
      %v266 = vpop.permute.xlu0 %265
      %v268 = vadd.f32 %v262, %v266
      %v269 = vtanh.pop %v268
      %271 = vrot.lane.b32.xlu0 %v269, 64
      %v272 = vpop.permute.xlu0 %271
      %v274 = vmul.f32 %v261, %v272
    $region57: #{neural_network_forward.1} parent=1 // loop_footer
      %s123 = sadd.s32 1, %s119
    $region58: #{neural_network_forward.1} parent=1 // loop_footer_branch
      %118 = sbr.rel target = $region54
    $region59: #{neural_network_forward.1} parent=1 // loop_exit
      _
    %v275 = vpack.c.bf16 %v124, %v124
    %v276 = vld [vmem:[%s4] sm:$0xff]
    %v277 = vld [vmem:[%s4 + $0x8] sm:$0xf]
    %v278 = vld [vmem:[%s4 + $0xc] sm:$0xff]
    %v279 = vld [vmem:[%s4 + $0x14] sm:$0xf]
    %v280 = vld [vmem:[%s4 + $0x18] sm:$0xff]
    %v281 = vld [vmem:[%s4 + $0x20] sm:$0xf]
    %v282 = vld [vmem:[%s4 + $0x24] sm:$0xff]
    %v283 = vld [vmem:[%s4 + $0x2c] sm:$0xf]
    %v284 = vld [vmem:[%s4 + $0x30] sm:$0xff]
    %v285 = vld [vmem:[%s4 + $0x38] sm:$0xf]
    %v286 = vld [vmem:[%s4 + $0x3c] sm:$0xff]
    %v287 = vld [vmem:[%s4 + $0x44] sm:$0xf]
    %v288 = vld [vmem:[%s4 + $0x48] sm:$0xff]
    %v289 = vld [vmem:[%s4 + $0x50] sm:$0xf]
    %v290 = vld [vmem:[%s4 + $0x54] sm:$0xff]
    %v291 = vld [vmem:[%s4 + $0x5c] sm:$0xf]
    %v292 = vld [vmem:[%s5] sm:$0x7]
    %v294 = vperm.slane %v292, 0
    %v295 = vperm.slane %v292, 1
    %v296 = vperm.slane %v292, 2
    %v316 = vunpack.c.l.b16 %v276
    %v317 = vunpack.c.h.b16 %v276
    %v318 = vunpack.c.l.b16 %v277
    %v319 = vunpack.c.l.b16 %v278
    %v320 = vunpack.c.h.b16 %v278
    %v321 = vunpack.c.l.b16 %v279
    %v322 = vunpack.c.l.b16 %v280
    %v323 = vunpack.c.h.b16 %v280
    %v324 = vunpack.c.l.b16 %v281
    %v325 = vunpack.c.l.b16 %v282
    %v326 = vunpack.c.h.b16 %v282
    %v327 = vunpack.c.l.b16 %v283
    %v328 = vunpack.c.l.b16 %v284
    %v329 = vunpack.c.h.b16 %v284
    %v330 = vunpack.c.l.b16 %v285
    %v331 = vunpack.c.l.b16 %v286
    %v332 = vunpack.c.h.b16 %v286
    %v333 = vunpack.c.l.b16 %v287
    %v334 = vunpack.c.l.b16 %v288
    %v335 = vunpack.c.h.b16 %v288
    %v336 = vunpack.c.l.b16 %v289
    %v337 = vunpack.c.l.b16 %v290
    %v338 = vunpack.c.h.b16 %v290
    %v339 = vunpack.c.l.b16 %v291
    %v340 = vpack.c.b16 %v319, %v316
    %v341 = vpack.c.b16 %v320, %v317
    %v342 = vpack.c.b16 %v321, %v318
    %v343 = vpack.c.b16 %v325, %v322
    %v344 = vpack.c.b16 %v326, %v323
    %v345 = vpack.c.b16 %v327, %v324
    %v346 = vpack.c.b16 %v331, %v328
    %v347 = vpack.c.b16 %v332, %v329
    %v348 = vpack.c.b16 %v333, %v330
    %v349 = vpack.c.b16 %v337, %v334
    %v350 = vpack.c.b16 %v338, %v335
    %v351 = vpack.c.b16 %v339, %v336
    %vm364 = vcmask 523264
    %v366 = vsel %vm364, %v275, 0
    %368 = vmatpush.bf16.msra.mxu0 0
    %369 = vmatpush.bf16.msra.mxu0 0
    %370 = vmatpush.bf16.msra.mxu0 0
    %371 = vmatpush.bf16.msra.mxu0 0
    %372 = vmatpush.bf16.msra.mxu0 %v349
    %373 = vmatpush.bf16.msra.mxu0 %v346
    %374 = vmatpush.bf16.msra.mxu0 %v343
    %375 = vmatpush.bf16.msra.mxu0 %v340
    %376 = vmatmul.bf16.gmra.mxu0 %v366
    %v377 = vpop.f32.mrf.mxu0
    %v378 = vadd.f32 %v294, %v377
    %v379 = vpop.f32.mrf.mxu0
    %380 = vdwg.mxu0
    %381 = vmatpush.bf16.msra.mxu0 0
    %382 = vmatpush.bf16.msra.mxu0 0
    %383 = vmatpush.bf16.msra.mxu0 0
    %384 = vmatpush.bf16.msra.mxu0 0
    %385 = vmatpush.bf16.msra.mxu0 %v350
    %386 = vmatpush.bf16.msra.mxu0 %v347
    %387 = vmatpush.bf16.msra.mxu0 %v344
    %388 = vmatpush.bf16.msra.mxu0 %v341
    %389 = vmatmul.bf16.gmra.mxu0 %v366
    %v390 = vpop.f32.mrf.mxu0
    %v391 = vadd.f32 %v295, %v390
    %v392 = vpop.f32.mrf.mxu0
    %393 = vdwg.mxu0
    %394 = vmatpush.bf16.msra.mxu0 0
    %395 = vmatpush.bf16.msra.mxu0 0
    %396 = vmatpush.bf16.msra.mxu0 0
    %397 = vmatpush.bf16.msra.mxu0 0
    %398 = vmatpush.bf16.msra.mxu0 %v351
    %399 = vmatpush.bf16.msra.mxu0 %v348
    %400 = vmatpush.bf16.msra.mxu0 %v345
    %401 = vmatpush.bf16.msra.mxu0 %v342
    %402 = vmatmul.bf16.gmra.mxu0 %v366
    %v403 = vpop.f32.mrf.mxu0
    %v404 = vadd.f32 %v296, %v403
    %v405 = vpop.f32.mrf.mxu0
    %406 = vdwg.mxu0
    %v407 = vmax.f32 %v378, 0.0
    %v408 = vmax.f32 %v391, 0.0
    %v409 = vmax.f32 %v404, 0.0
    %v410 = vld [vmem:[%s6] sm:$0x7]
    %v412 = vperm.slane %v410, 0
    %v413 = vperm.slane %v410, 1
    %v414 = vperm.slane %v410, 2
    %v418 = vmul.f32 %v407, %v412
    %v419 = vmul.f32 %v408, %v413
    %v420 = vmul.f32 %v409, %v414
    %v421 = vld [vmem:[%s7] sm:$0x7]
    %v423 = vperm.slane %v421, 0
    %v424 = vperm.slane %v421, 1
    %v425 = vperm.slane %v421, 2
    %v429 = vadd.f32 %v418, %v423
    %v430 = vadd.f32 %v419, %v424
    %v431 = vadd.f32 %v420, %v425
    %v432 = vlaneseq
    %v433 = vshrl.u32 %v432, 7
    %v434 = vadd.s32 %v433, 8
    %v435 = vadd.s32 %v433, 16
    %v436 = vadd.s32 %v433, 24
    %v437 = vadd.s32 %v433, 32
    %v438 = vadd.s32 %v433, 40
    %v439 = vadd.s32 %v433, 48
    %v440 = vadd.s32 %v433, 56
    %v441 = vadd.s32 %v433, 64
    %v442 = vadd.s32 %v433, 72
    %v443 = vadd.s32 %v433, 80
    %v444 = vadd.s32 %v433, 88
    %v445 = vadd.s32 %v433, 96
    %v446 = vadd.s32 %v433, 104
    %v447 = vadd.s32 %v433, 112
    %v448 = vadd.s32 %v433, 120
    %v449 = vlaneseq
    %v450 = vand.u32 %v449, 127
    %v451 = vadd.s32 %v450, 128
    %v452 = vand.u32 %v450, 63
    %v453 = vand.u32 %v451, 63
    %v454 = vmul.u32 %v452, 2
    %v455 = vmul.u32 %v453, 2
    %v456 = vshra.s32 %v450, 6
    %v457 = vshra.s32 %v451, 6
    %v458 = vadd.s32 %v454, %v456
    %v459 = vadd.s32 %v455, %v457
    %v460 = vsub.s32 %v458, 1
    %v461 = vsub.s32 %v459, 1
    %vm462 = vcmp.eq.s32.totalorder %v433, %v460
    %vm463 = vcmp.eq.s32.totalorder %v433, %v461
    %vm464 = vcmp.eq.s32.totalorder %v434, %v460
    %vm465 = vcmp.eq.s32.totalorder %v434, %v461
    %vm466 = vcmp.eq.s32.totalorder %v435, %v460
    %vm467 = vcmp.eq.s32.totalorder %v435, %v461
    %vm468 = vcmp.eq.s32.totalorder %v436, %v460
    %vm469 = vcmp.eq.s32.totalorder %v436, %v461
    %vm470 = vcmp.eq.s32.totalorder %v437, %v460
    %vm471 = vcmp.eq.s32.totalorder %v437, %v461
    %vm472 = vcmp.eq.s32.totalorder %v438, %v460
    %vm473 = vcmp.eq.s32.totalorder %v438, %v461
    %vm474 = vcmp.eq.s32.totalorder %v439, %v460
    %vm475 = vcmp.eq.s32.totalorder %v439, %v461
    %vm476 = vcmp.eq.s32.totalorder %v440, %v460
    %vm477 = vcmp.eq.s32.totalorder %v440, %v461
    %vm478 = vcmp.eq.s32.totalorder %v441, %v460
    %vm479 = vcmp.eq.s32.totalorder %v441, %v461
    %vm480 = vcmp.eq.s32.totalorder %v442, %v460
    %vm481 = vcmp.eq.s32.totalorder %v442, %v461
    %vm482 = vcmp.eq.s32.totalorder %v443, %v460
    %vm483 = vcmp.eq.s32.totalorder %v443, %v461
    %vm484 = vcmp.eq.s32.totalorder %v444, %v460
    %vm485 = vcmp.eq.s32.totalorder %v444, %v461
    %vm486 = vcmp.eq.s32.totalorder %v445, %v460
    %vm487 = vcmp.eq.s32.totalorder %v445, %v461
    %vm488 = vcmp.eq.s32.totalorder %v446, %v460
    %vm489 = vcmp.eq.s32.totalorder %v446, %v461
    %vm490 = vcmp.eq.s32.totalorder %v447, %v460
    %vm491 = vcmp.eq.s32.totalorder %v447, %v461
    %vm492 = vcmp.eq.s32.totalorder %v448, %v460
    %vm493 = vcmp.eq.s32.totalorder %v448, %v461
    %v494 = vsel %vm462, 1, 0
    %v495 = vsel %vm463, 1, 0
    %v496 = vsel %vm464, 1, 0
    %v497 = vsel %vm465, 1, 0
    %v498 = vsel %vm466, 1, 0
    %v499 = vsel %vm467, 1, 0
    %v500 = vsel %vm468, 1, 0
    %v501 = vsel %vm469, 1, 0
    %v502 = vsel %vm470, 1, 0
    %v503 = vsel %vm471, 1, 0
    %v504 = vsel %vm472, 1, 0
    %v505 = vsel %vm473, 1, 0
    %v506 = vsel %vm474, 1, 0
    %v507 = vsel %vm475, 1, 0
    %v508 = vsel %vm476, 1, 0
    %v509 = vsel %vm477, 1, 0
    %v510 = vsel %vm478, 1, 0
    %v511 = vsel %vm479, 1, 0
    %v512 = vsel %vm480, 1, 0
    %v513 = vsel %vm481, 1, 0
    %v514 = vsel %vm482, 1, 0
    %v515 = vsel %vm483, 1, 0
    %v516 = vsel %vm484, 1, 0
    %v517 = vsel %vm485, 1, 0
    %v518 = vsel %vm486, 1, 0
    %v519 = vsel %vm487, 1, 0
    %v520 = vsel %vm488, 1, 0
    %v521 = vsel %vm489, 1, 0
    %v522 = vsel %vm490, 1, 0
    %v523 = vsel %vm491, 1, 0
    %v524 = vsel %vm492, 1, 0
    %v525 = vsel %vm493, 1, 0
    %v526 = vcvt.s32.f32 %v494
    %v527 = vcvt.s32.f32 %v495
    %v528 = vcvt.s32.f32 %v496
    %v529 = vcvt.s32.f32 %v497
    %v530 = vcvt.s32.f32 %v498
    %v531 = vcvt.s32.f32 %v499
    %v532 = vcvt.s32.f32 %v500
    %v533 = vcvt.s32.f32 %v501
    %v534 = vcvt.s32.f32 %v502
    %v535 = vcvt.s32.f32 %v503
    %v536 = vcvt.s32.f32 %v504
    %v537 = vcvt.s32.f32 %v505
    %v538 = vcvt.s32.f32 %v506
    %v539 = vcvt.s32.f32 %v507
    %v540 = vcvt.s32.f32 %v508
    %v541 = vcvt.s32.f32 %v509
    %v542 = vcvt.s32.f32 %v510
    %v543 = vcvt.s32.f32 %v511
    %v544 = vcvt.s32.f32 %v512
    %v545 = vcvt.s32.f32 %v513
    %v546 = vcvt.s32.f32 %v514
    %v547 = vcvt.s32.f32 %v515
    %v548 = vcvt.s32.f32 %v516
    %v549 = vcvt.s32.f32 %v517
    %v550 = vcvt.s32.f32 %v518
    %v551 = vcvt.s32.f32 %v519
    %v552 = vcvt.s32.f32 %v520
    %v553 = vcvt.s32.f32 %v521
    %v554 = vcvt.s32.f32 %v522
    %v555 = vcvt.s32.f32 %v523
    %v556 = vcvt.s32.f32 %v524
    %v557 = vcvt.s32.f32 %v525
    %v558 = vld [vmem:[%s10] sm:$0x1]
    %v560 = vperm.slane %v558, 0
    %v562 = vadd.f32 %v560, 0.0
    %v563 = vld [vmem:[%s8] sm:$0xf]
    %v564 = vperm.slane %v563, 0
    %v565 = vmul.f32 %v564, %v429
    %v566 = vperm.slane %v563, 1
    %v567 = vmul.f32 %v566, %v430
    %v568 = vadd.f32 %v565, %v567
    %v569 = vperm.slane %v563, 2
    %v570 = vmul.f32 %v569, %v431
    %v571 = vadd.f32 %v568, %v570
    %v572 = vperm.slane %v563, 3
    %v573 = vadd.f32 %v571, %v572
    %v574 = vmax.f32 %v573, 0.0
    %575 = vmatpush.msra.mxu0 %v556
    %576 = vmatpush.msra.mxu0 %v554
    %577 = vmatpush.msra.mxu0 %v552
    %578 = vmatpush.msra.mxu0 %v550
    %579 = vmatpush.msra.mxu0 %v548
    %580 = vmatpush.msra.mxu0 %v546
    %581 = vmatpush.msra.mxu0 %v544
    %582 = vmatpush.msra.mxu0 %v542
    %583 = vmatpush.msra.mxu0 %v540
    %584 = vmatpush.msra.mxu0 %v538
    %585 = vmatpush.msra.mxu0 %v536
    %586 = vmatpush.msra.mxu0 %v534
    %587 = vmatpush.msra.mxu0 %v532
    %588 = vmatpush.msra.mxu0 %v530
    %589 = vmatpush.msra.mxu0 %v528
    %590 = vmatpush.msra.mxu0 %v526
    %591 = vmatmul.f32.gmra.mxu0 %v574
    %v592 = vpop.f32.mrf.mxu0
    %v593 = vadd.f32 0.0, %v592
    %594 = vdwg.mxu0
    %595 = vmatpush.msra.mxu0 %v557
    %596 = vmatpush.msra.mxu0 %v555
    %597 = vmatpush.msra.mxu0 %v553
    %598 = vmatpush.msra.mxu0 %v551
    %599 = vmatpush.msra.mxu0 %v549
    %600 = vmatpush.msra.mxu0 %v547
    %601 = vmatpush.msra.mxu0 %v545
    %602 = vmatpush.msra.mxu0 %v543
    %603 = vmatpush.msra.mxu0 %v541
    %604 = vmatpush.msra.mxu0 %v539
    %605 = vmatpush.msra.mxu0 %v537
    %606 = vmatpush.msra.mxu0 %v535
    %607 = vmatpush.msra.mxu0 %v533
    %608 = vmatpush.msra.mxu0 %v531
    %609 = vmatpush.msra.mxu0 %v529
    %610 = vmatpush.msra.mxu0 %v527
    %611 = vmatmul.f32.gmra.mxu0 %v574
    %v612 = vpop.f32.mrf.mxu0
    %v613 = vadd.f32 0.0, %v612
    %614 = vdwg.mxu0
    %616 = vrot.lane.b32.xlu0 %v593, 64
    %v617 = vpop.permute.xlu0 %616
    %v619 = vmax.f32 %v593, %v617
    %v620 = vmax.f32 %v619, %v613
    %v621 = vld [vmem:[%s9] sm:$0xff]
    %v622 = vld [vmem:[%s9 + $0x8] sm:$0xff]
    %v623 = vld [vmem:[%s9 + $0x10] sm:$0xff]
    %v624 = vld [vmem:[%s9 + $0x18] sm:$0xff]
    %v625 = vld [vmem:[%s9 + $0x20] sm:$0xff]
    %v626 = vld [vmem:[%s9 + $0x28] sm:$0xff]
    %v627 = vld [vmem:[%s9 + $0x30] sm:$0xff]
    %v628 = vld [vmem:[%s9 + $0x38] sm:$0xff]
    %v630 = vsel %vm364, %v620, 0
    %632 = vmatpush.msra.mxu0 0.0
    %633 = vmatpush.msra.mxu0 0.0
    %634 = vmatpush.msra.mxu0 0.0
    %635 = vmatpush.msra.mxu0 0.0
    %636 = vmatpush.msra.mxu0 0.0
    %637 = vmatpush.msra.mxu0 0.0
    %638 = vmatpush.msra.mxu0 0.0
    %639 = vmatpush.msra.mxu0 0.0
    %640 = vmatpush.msra.mxu0 %v628
    %641 = vmatpush.msra.mxu0 %v627
    %642 = vmatpush.msra.mxu0 %v626
    %643 = vmatpush.msra.mxu0 %v625
    %644 = vmatpush.msra.mxu0 %v624
    %645 = vmatpush.msra.mxu0 %v623
    %646 = vmatpush.msra.mxu0 %v622
    %647 = vmatpush.msra.mxu0 %v621
    %648 = vmatmul.f32.gmra.mxu0 %v630
    %v649 = vpop.f32.mrf.mxu0
    %v650 = vadd.f32 0.0, %v649
    %651 = vdwg.mxu0
    %v652 = vadd.f32 %v562, %v650
    %s653 = scalar_lea.vmem %s8, 4
    %v654 = vld [vmem:[%s653] sm:$0xf]
    %v655 = vperm.slane %v654, 0
    %v656 = vmul.f32 %v655, %v429
    %v657 = vperm.slane %v654, 1
    %v658 = vmul.f32 %v657, %v430
    %v659 = vadd.f32 %v656, %v658
    %v660 = vperm.slane %v654, 2
    %v661 = vmul.f32 %v660, %v431
    %v662 = vadd.f32 %v659, %v661
    %v663 = vperm.slane %v654, 3
    %v664 = vadd.f32 %v662, %v663
    %v665 = vmax.f32 %v664, 0.0
    %666 = vmatpush.msra.mxu0 %v556
    %667 = vmatpush.msra.mxu0 %v554
    %668 = vmatpush.msra.mxu0 %v552
    %669 = vmatpush.msra.mxu0 %v550
    %670 = vmatpush.msra.mxu0 %v548
    %671 = vmatpush.msra.mxu0 %v546
    %672 = vmatpush.msra.mxu0 %v544
    %673 = vmatpush.msra.mxu0 %v542
    %674 = vmatpush.msra.mxu0 %v540
    %675 = vmatpush.msra.mxu0 %v538
    %676 = vmatpush.msra.mxu0 %v536
    %677 = vmatpush.msra.mxu0 %v534
    %678 = vmatpush.msra.mxu0 %v532
    %679 = vmatpush.msra.mxu0 %v530
    %680 = vmatpush.msra.mxu0 %v528
    %681 = vmatpush.msra.mxu0 %v526
    %682 = vmatmul.f32.gmra.mxu0 %v665
    %v683 = vpop.f32.mrf.mxu0
    %v684 = vadd.f32 0.0, %v683
    %685 = vdwg.mxu0
    %686 = vmatpush.msra.mxu0 %v557
    %687 = vmatpush.msra.mxu0 %v555
    %688 = vmatpush.msra.mxu0 %v553
    %689 = vmatpush.msra.mxu0 %v551
    %690 = vmatpush.msra.mxu0 %v549
    %691 = vmatpush.msra.mxu0 %v547
    %692 = vmatpush.msra.mxu0 %v545
    %693 = vmatpush.msra.mxu0 %v543
    %694 = vmatpush.msra.mxu0 %v541
    %695 = vmatpush.msra.mxu0 %v539
    %696 = vmatpush.msra.mxu0 %v537
    %697 = vmatpush.msra.mxu0 %v535
    %698 = vmatpush.msra.mxu0 %v533
    %699 = vmatpush.msra.mxu0 %v531
    %700 = vmatpush.msra.mxu0 %v529
    %701 = vmatpush.msra.mxu0 %v527
    %702 = vmatmul.f32.gmra.mxu0 %v665
    %v703 = vpop.f32.mrf.mxu0
    %v704 = vadd.f32 0.0, %v703
    %705 = vdwg.mxu0
    %707 = vrot.lane.b32.xlu0 %v684, 64
    %v708 = vpop.permute.xlu0 %707
    %v710 = vmax.f32 %v684, %v708
    %v711 = vmax.f32 %v710, %v704
    %s712 = scalar_lea.vmem %s9, 64
    %v713 = vld [vmem:[%s712] sm:$0xff]
    %v714 = vld [vmem:[%s712 + $0x8] sm:$0xff]
    %v715 = vld [vmem:[%s712 + $0x10] sm:$0xff]
    %v716 = vld [vmem:[%s712 + $0x18] sm:$0xff]
    %v717 = vld [vmem:[%s712 + $0x20] sm:$0xff]
    %v718 = vld [vmem:[%s712 + $0x28] sm:$0xff]
    %v719 = vld [vmem:[%s712 + $0x30] sm:$0xff]
    %v720 = vld [vmem:[%s712 + $0x38] sm:$0xff]
    %v722 = vsel %vm364, %v711, 0
    %724 = vmatpush.msra.mxu0 0.0
    %725 = vmatpush.msra.mxu0 0.0
    %726 = vmatpush.msra.mxu0 0.0
    %727 = vmatpush.msra.mxu0 0.0
    %728 = vmatpush.msra.mxu0 0.0
    %729 = vmatpush.msra.mxu0 0.0
    %730 = vmatpush.msra.mxu0 0.0
    %731 = vmatpush.msra.mxu0 0.0
    %732 = vmatpush.msra.mxu0 %v720
    %733 = vmatpush.msra.mxu0 %v719
    %734 = vmatpush.msra.mxu0 %v718
    %735 = vmatpush.msra.mxu0 %v717
    %736 = vmatpush.msra.mxu0 %v716
    %737 = vmatpush.msra.mxu0 %v715
    %738 = vmatpush.msra.mxu0 %v714
    %739 = vmatpush.msra.mxu0 %v713
    %740 = vmatmul.f32.gmra.mxu0 %v722
    %v741 = vpop.f32.mrf.mxu0
    %v742 = vadd.f32 0.0, %v741
    %743 = vdwg.mxu0
    %v744 = vadd.f32 %v652, %v742
    %s745 = scalar_lea.vmem %s8, 8
    %v746 = vld [vmem:[%s745] sm:$0xf]
    %v747 = vperm.slane %v746, 0
    %v748 = vmul.f32 %v747, %v429
    %v749 = vperm.slane %v746, 1
    %v750 = vmul.f32 %v749, %v430
    %v751 = vadd.f32 %v748, %v750
    %v752 = vperm.slane %v746, 2
    %v753 = vmul.f32 %v752, %v431
    %v754 = vadd.f32 %v751, %v753
    %v755 = vperm.slane %v746, 3
    %v756 = vadd.f32 %v754, %v755
    %v757 = vmax.f32 %v756, 0.0
    %758 = vmatpush.msra.mxu0 %v556
    %759 = vmatpush.msra.mxu0 %v554
    %760 = vmatpush.msra.mxu0 %v552
    %761 = vmatpush.msra.mxu0 %v550
    %762 = vmatpush.msra.mxu0 %v548
    %763 = vmatpush.msra.mxu0 %v546
    %764 = vmatpush.msra.mxu0 %v544
    %765 = vmatpush.msra.mxu0 %v542
    %766 = vmatpush.msra.mxu0 %v540
    %767 = vmatpush.msra.mxu0 %v538
    %768 = vmatpush.msra.mxu0 %v536
    %769 = vmatpush.msra.mxu0 %v534
    %770 = vmatpush.msra.mxu0 %v532
    %771 = vmatpush.msra.mxu0 %v530
    %772 = vmatpush.msra.mxu0 %v528
    %773 = vmatpush.msra.mxu0 %v526
    %774 = vmatmul.f32.gmra.mxu0 %v757
    %v775 = vpop.f32.mrf.mxu0
    %v776 = vadd.f32 0.0, %v775
    %777 = vdwg.mxu0
    %778 = vmatpush.msra.mxu0 %v557
    %779 = vmatpush.msra.mxu0 %v555
    %780 = vmatpush.msra.mxu0 %v553
    %781 = vmatpush.msra.mxu0 %v551
    %782 = vmatpush.msra.mxu0 %v549
    %783 = vmatpush.msra.mxu0 %v547
    %784 = vmatpush.msra.mxu0 %v545
    %785 = vmatpush.msra.mxu0 %v543
    %786 = vmatpush.msra.mxu0 %v541
    %787 = vmatpush.msra.mxu0 %v539
    %788 = vmatpush.msra.mxu0 %v537
    %789 = vmatpush.msra.mxu0 %v535
    %790 = vmatpush.msra.mxu0 %v533
    %791 = vmatpush.msra.mxu0 %v531
    %792 = vmatpush.msra.mxu0 %v529
    %793 = vmatpush.msra.mxu0 %v527
    %794 = vmatmul.f32.gmra.mxu0 %v757
    %v795 = vpop.f32.mrf.mxu0
    %v796 = vadd.f32 0.0, %v795
    %797 = vdwg.mxu0
    %799 = vrot.lane.b32.xlu0 %v776, 64
    %v800 = vpop.permute.xlu0 %799
    %v802 = vmax.f32 %v776, %v800
    %v803 = vmax.f32 %v802, %v796
    %s804 = scalar_lea.vmem %s9, 128
    %v805 = vld [vmem:[%s804] sm:$0xff]
    %v806 = vld [vmem:[%s804 + $0x8] sm:$0xff]
    %v807 = vld [vmem:[%s804 + $0x10] sm:$0xff]
    %v808 = vld [vmem:[%s804 + $0x18] sm:$0xff]
    %v809 = vld [vmem:[%s804 + $0x20] sm:$0xff]
    %v810 = vld [vmem:[%s804 + $0x28] sm:$0xff]
    %v811 = vld [vmem:[%s804 + $0x30] sm:$0xff]
    %v812 = vld [vmem:[%s804 + $0x38] sm:$0xff]
    %v814 = vsel %vm364, %v803, 0
    %816 = vmatpush.msra.mxu0 0.0
    %817 = vmatpush.msra.mxu0 0.0
    %818 = vmatpush.msra.mxu0 0.0
    %819 = vmatpush.msra.mxu0 0.0
    %820 = vmatpush.msra.mxu0 0.0
    %821 = vmatpush.msra.mxu0 0.0
    %822 = vmatpush.msra.mxu0 0.0
    %823 = vmatpush.msra.mxu0 0.0
    %824 = vmatpush.msra.mxu0 %v812
    %825 = vmatpush.msra.mxu0 %v811
    %826 = vmatpush.msra.mxu0 %v810
    %827 = vmatpush.msra.mxu0 %v809
    %828 = vmatpush.msra.mxu0 %v808
    %829 = vmatpush.msra.mxu0 %v807
    %830 = vmatpush.msra.mxu0 %v806
    %831 = vmatpush.msra.mxu0 %v805
    %832 = vmatmul.f32.gmra.mxu0 %v814
    %v833 = vpop.f32.mrf.mxu0
    %v834 = vadd.f32 0.0, %v833
    %835 = vdwg.mxu0
    %v836 = vadd.f32 %v744, %v834
    %s837 = scalar_lea.vmem %s8, 12
    %v838 = vld [vmem:[%s837] sm:$0xf]
    %v839 = vperm.slane %v838, 0
    %v840 = vmul.f32 %v839, %v429
    %v841 = vperm.slane %v838, 1
    %v842 = vmul.f32 %v841, %v430
    %v843 = vadd.f32 %v840, %v842
    %v844 = vperm.slane %v838, 2
    %v845 = vmul.f32 %v844, %v431
    %v846 = vadd.f32 %v843, %v845
    %v847 = vperm.slane %v838, 3
    %v848 = vadd.f32 %v846, %v847
    %v849 = vmax.f32 %v848, 0.0
    %850 = vmatpush.msra.mxu0 %v556
    %851 = vmatpush.msra.mxu0 %v554
    %852 = vmatpush.msra.mxu0 %v552
    %853 = vmatpush.msra.mxu0 %v550
    %854 = vmatpush.msra.mxu0 %v548
    %855 = vmatpush.msra.mxu0 %v546
    %856 = vmatpush.msra.mxu0 %v544
    %857 = vmatpush.msra.mxu0 %v542
    %858 = vmatpush.msra.mxu0 %v540
    %859 = vmatpush.msra.mxu0 %v538
    %860 = vmatpush.msra.mxu0 %v536
    %861 = vmatpush.msra.mxu0 %v534
    %862 = vmatpush.msra.mxu0 %v532
    %863 = vmatpush.msra.mxu0 %v530
    %864 = vmatpush.msra.mxu0 %v528
    %865 = vmatpush.msra.mxu0 %v526
    %866 = vmatmul.f32.gmra.mxu0 %v849
    %v867 = vpop.f32.mrf.mxu0
    %v868 = vadd.f32 0.0, %v867
    %869 = vdwg.mxu0
    %870 = vmatpush.msra.mxu0 %v557
    %871 = vmatpush.msra.mxu0 %v555
    %872 = vmatpush.msra.mxu0 %v553
    %873 = vmatpush.msra.mxu0 %v551
    %874 = vmatpush.msra.mxu0 %v549
    %875 = vmatpush.msra.mxu0 %v547
    %876 = vmatpush.msra.mxu0 %v545
    %877 = vmatpush.msra.mxu0 %v543
    %878 = vmatpush.msra.mxu0 %v541
    %879 = vmatpush.msra.mxu0 %v539
    %880 = vmatpush.msra.mxu0 %v537
    %881 = vmatpush.msra.mxu0 %v535
    %882 = vmatpush.msra.mxu0 %v533
    %883 = vmatpush.msra.mxu0 %v531
    %884 = vmatpush.msra.mxu0 %v529
    %885 = vmatpush.msra.mxu0 %v527
    %886 = vmatmul.f32.gmra.mxu0 %v849
    %v887 = vpop.f32.mrf.mxu0
    %v888 = vadd.f32 0.0, %v887
    %889 = vdwg.mxu0
    %891 = vrot.lane.b32.xlu0 %v868, 64
    %v892 = vpop.permute.xlu0 %891
    %v894 = vmax.f32 %v868, %v892
    %v895 = vmax.f32 %v894, %v888
    %s896 = scalar_lea.vmem %s9, 192
    %v897 = vld [vmem:[%s896] sm:$0xff]
    %v898 = vld [vmem:[%s896 + $0x8] sm:$0xff]
    %v899 = vld [vmem:[%s896 + $0x10] sm:$0xff]
    %v900 = vld [vmem:[%s896 + $0x18] sm:$0xff]
    %v901 = vld [vmem:[%s896 + $0x20] sm:$0xff]
    %v902 = vld [vmem:[%s896 + $0x28] sm:$0xff]
    %v903 = vld [vmem:[%s896 + $0x30] sm:$0xff]
    %v904 = vld [vmem:[%s896 + $0x38] sm:$0xff]
    %v906 = vsel %vm364, %v895, 0
    %908 = vmatpush.msra.mxu0 0.0
    %909 = vmatpush.msra.mxu0 0.0
    %910 = vmatpush.msra.mxu0 0.0
    %911 = vmatpush.msra.mxu0 0.0
    %912 = vmatpush.msra.mxu0 0.0
    %913 = vmatpush.msra.mxu0 0.0
    %914 = vmatpush.msra.mxu0 0.0
    %915 = vmatpush.msra.mxu0 0.0
    %916 = vmatpush.msra.mxu0 %v904
    %917 = vmatpush.msra.mxu0 %v903
    %918 = vmatpush.msra.mxu0 %v902
    %919 = vmatpush.msra.mxu0 %v901
    %920 = vmatpush.msra.mxu0 %v900
    %921 = vmatpush.msra.mxu0 %v899
    %922 = vmatpush.msra.mxu0 %v898
    %923 = vmatpush.msra.mxu0 %v897
    %924 = vmatmul.f32.gmra.mxu0 %v906
    %v925 = vpop.f32.mrf.mxu0
    %v926 = vadd.f32 0.0, %v925
    %927 = vdwg.mxu0
    %v928 = vadd.f32 %v836, %v926
    %s929 = scalar_lea.vmem %s8, 16
    %v930 = vld [vmem:[%s929] sm:$0xf]
    %v931 = vperm.slane %v930, 0
    %v932 = vmul.f32 %v931, %v429
    %v933 = vperm.slane %v930, 1
    %v934 = vmul.f32 %v933, %v430
    %v935 = vadd.f32 %v932, %v934
    %v936 = vperm.slane %v930, 2
    %v937 = vmul.f32 %v936, %v431
    %v938 = vadd.f32 %v935, %v937
    %v939 = vperm.slane %v930, 3
    %v940 = vadd.f32 %v938, %v939
    %v941 = vmax.f32 %v940, 0.0
    %942 = vmatpush.msra.mxu0 %v556
    %943 = vmatpush.msra.mxu0 %v554
    %944 = vmatpush.msra.mxu0 %v552
    %945 = vmatpush.msra.mxu0 %v550
    %946 = vmatpush.msra.mxu0 %v548
    %947 = vmatpush.msra.mxu0 %v546
    %948 = vmatpush.msra.mxu0 %v544
    %949 = vmatpush.msra.mxu0 %v542
    %950 = vmatpush.msra.mxu0 %v540
    %951 = vmatpush.msra.mxu0 %v538
    %952 = vmatpush.msra.mxu0 %v536
    %953 = vmatpush.msra.mxu0 %v534
    %954 = vmatpush.msra.mxu0 %v532
    %955 = vmatpush.msra.mxu0 %v530
    %956 = vmatpush.msra.mxu0 %v528
    %957 = vmatpush.msra.mxu0 %v526
    %958 = vmatmul.f32.gmra.mxu0 %v941
    %v959 = vpop.f32.mrf.mxu0
    %v960 = vadd.f32 0.0, %v959
    %961 = vdwg.mxu0
    %962 = vmatpush.msra.mxu0 %v557
    %963 = vmatpush.msra.mxu0 %v555
    %964 = vmatpush.msra.mxu0 %v553
    %965 = vmatpush.msra.mxu0 %v551
    %966 = vmatpush.msra.mxu0 %v549
    %967 = vmatpush.msra.mxu0 %v547
    %968 = vmatpush.msra.mxu0 %v545
    %969 = vmatpush.msra.mxu0 %v543
    %970 = vmatpush.msra.mxu0 %v541
    %971 = vmatpush.msra.mxu0 %v539
    %972 = vmatpush.msra.mxu0 %v537
    %973 = vmatpush.msra.mxu0 %v535
    %974 = vmatpush.msra.mxu0 %v533
    %975 = vmatpush.msra.mxu0 %v531
    %976 = vmatpush.msra.mxu0 %v529
    %977 = vmatpush.msra.mxu0 %v527
    %978 = vmatmul.f32.gmra.mxu0 %v941
    %v979 = vpop.f32.mrf.mxu0
    %v980 = vadd.f32 0.0, %v979
    %981 = vdwg.mxu0
    %983 = vrot.lane.b32.xlu0 %v960, 64
    %v984 = vpop.permute.xlu0 %983
    %v986 = vmax.f32 %v960, %v984
    %v987 = vmax.f32 %v986, %v980
    %s988 = scalar_lea.vmem %s9, 256
    %v989 = vld [vmem:[%s988] sm:$0xff]
    %v990 = vld [vmem:[%s988 + $0x8] sm:$0xff]
    %v991 = vld [vmem:[%s988 + $0x10] sm:$0xff]
    %v992 = vld [vmem:[%s988 + $0x18] sm:$0xff]
    %v993 = vld [vmem:[%s988 + $0x20] sm:$0xff]
    %v994 = vld [vmem:[%s988 + $0x28] sm:$0xff]
    %v995 = vld [vmem:[%s988 + $0x30] sm:$0xff]
    %v996 = vld [vmem:[%s988 + $0x38] sm:$0xff]
    %v998 = vsel %vm364, %v987, 0
    %1000 = vmatpush.msra.mxu0 0.0
    %1001 = vmatpush.msra.mxu0 0.0
    %1002 = vmatpush.msra.mxu0 0.0
    %1003 = vmatpush.msra.mxu0 0.0
    %1004 = vmatpush.msra.mxu0 0.0
    %1005 = vmatpush.msra.mxu0 0.0
    %1006 = vmatpush.msra.mxu0 0.0
    %1007 = vmatpush.msra.mxu0 0.0
    %1008 = vmatpush.msra.mxu0 %v996
    %1009 = vmatpush.msra.mxu0 %v995
    %1010 = vmatpush.msra.mxu0 %v994
    %1011 = vmatpush.msra.mxu0 %v993
    %1012 = vmatpush.msra.mxu0 %v992
    %1013 = vmatpush.msra.mxu0 %v991
    %1014 = vmatpush.msra.mxu0 %v990
    %1015 = vmatpush.msra.mxu0 %v989
    %1016 = vmatmul.f32.gmra.mxu0 %v998
    %v1017 = vpop.f32.mrf.mxu0
    %v1018 = vadd.f32 0.0, %v1017
    %1019 = vdwg.mxu0
    %v1020 = vadd.f32 %v928, %v1018
    %s1021 = scalar_lea.vmem %s8, 20
    %v1022 = vld [vmem:[%s1021] sm:$0xf]
    %v1023 = vperm.slane %v1022, 0
    %v1024 = vmul.f32 %v1023, %v429
    %v1025 = vperm.slane %v1022, 1
    %v1026 = vmul.f32 %v1025, %v430
    %v1027 = vadd.f32 %v1024, %v1026
    %v1028 = vperm.slane %v1022, 2
    %v1029 = vmul.f32 %v1028, %v431
    %v1030 = vadd.f32 %v1027, %v1029
    %v1031 = vperm.slane %v1022, 3
    %v1032 = vadd.f32 %v1030, %v1031
    %v1033 = vmax.f32 %v1032, 0.0
    %1034 = vmatpush.msra.mxu0 %v556
    %1035 = vmatpush.msra.mxu0 %v554
    %1036 = vmatpush.msra.mxu0 %v552
    %1037 = vmatpush.msra.mxu0 %v550
    %1038 = vmatpush.msra.mxu0 %v548
    %1039 = vmatpush.msra.mxu0 %v546
    %1040 = vmatpush.msra.mxu0 %v544
    %1041 = vmatpush.msra.mxu0 %v542
    %1042 = vmatpush.msra.mxu0 %v540
    %1043 = vmatpush.msra.mxu0 %v538
    %1044 = vmatpush.msra.mxu0 %v536
    %1045 = vmatpush.msra.mxu0 %v534
    %1046 = vmatpush.msra.mxu0 %v532
    %1047 = vmatpush.msra.mxu0 %v530
    %1048 = vmatpush.msra.mxu0 %v528
    %1049 = vmatpush.msra.mxu0 %v526
    %1050 = vmatmul.f32.gmra.mxu0 %v1033
    %v1051 = vpop.f32.mrf.mxu0
    %v1052 = vadd.f32 0.0, %v1051
    %1053 = vdwg.mxu0
    %1054 = vmatpush.msra.mxu0 %v557
    %1055 = vmatpush.msra.mxu0 %v555
    %1056 = vmatpush.msra.mxu0 %v553
    %1057 = vmatpush.msra.mxu0 %v551
    %1058 = vmatpush.msra.mxu0 %v549
    %1059 = vmatpush.msra.mxu0 %v547
    %1060 = vmatpush.msra.mxu0 %v545
    %1061 = vmatpush.msra.mxu0 %v543
    %1062 = vmatpush.msra.mxu0 %v541
    %1063 = vmatpush.msra.mxu0 %v539
    %1064 = vmatpush.msra.mxu0 %v537
    %1065 = vmatpush.msra.mxu0 %v535
    %1066 = vmatpush.msra.mxu0 %v533
    %1067 = vmatpush.msra.mxu0 %v531
    %1068 = vmatpush.msra.mxu0 %v529
    %1069 = vmatpush.msra.mxu0 %v527
    %1070 = vmatmul.f32.gmra.mxu0 %v1033
    %v1071 = vpop.f32.mrf.mxu0
    %v1072 = vadd.f32 0.0, %v1071
    %1073 = vdwg.mxu0
    %1075 = vrot.lane.b32.xlu0 %v1052, 64
    %v1076 = vpop.permute.xlu0 %1075
    %v1078 = vmax.f32 %v1052, %v1076
    %v1079 = vmax.f32 %v1078, %v1072
    %s1080 = scalar_lea.vmem %s9, 320
    %v1081 = vld [vmem:[%s1080] sm:$0xff]
    %v1082 = vld [vmem:[%s1080 + $0x8] sm:$0xff]
    %v1083 = vld [vmem:[%s1080 + $0x10] sm:$0xff]
    %v1084 = vld [vmem:[%s1080 + $0x18] sm:$0xff]
    %v1085 = vld [vmem:[%s1080 + $0x20] sm:$0xff]
    %v1086 = vld [vmem:[%s1080 + $0x28] sm:$0xff]
    %v1087 = vld [vmem:[%s1080 + $0x30] sm:$0xff]
    %v1088 = vld [vmem:[%s1080 + $0x38] sm:$0xff]
    %v1090 = vsel %vm364, %v1079, 0
    %1092 = vmatpush.msra.mxu0 0.0
    %1093 = vmatpush.msra.mxu0 0.0
    %1094 = vmatpush.msra.mxu0 0.0
    %1095 = vmatpush.msra.mxu0 0.0
    %1096 = vmatpush.msra.mxu0 0.0
    %1097 = vmatpush.msra.mxu0 0.0
    %1098 = vmatpush.msra.mxu0 0.0
    %1099 = vmatpush.msra.mxu0 0.0
    %1100 = vmatpush.msra.mxu0 %v1088
    %1101 = vmatpush.msra.mxu0 %v1087
    %1102 = vmatpush.msra.mxu0 %v1086
    %1103 = vmatpush.msra.mxu0 %v1085
    %1104 = vmatpush.msra.mxu0 %v1084
    %1105 = vmatpush.msra.mxu0 %v1083
    %1106 = vmatpush.msra.mxu0 %v1082
    %1107 = vmatpush.msra.mxu0 %v1081
    %1108 = vmatmul.f32.gmra.mxu0 %v1090
    %v1109 = vpop.f32.mrf.mxu0
    %v1110 = vadd.f32 0.0, %v1109
    %1111 = vdwg.mxu0
    %v1112 = vadd.f32 %v1020, %v1110
    %s1113 = scalar_lea.vmem %s8, 24
    %v1114 = vld [vmem:[%s1113] sm:$0xf]
    %v1115 = vperm.slane %v1114, 0
    %v1116 = vmul.f32 %v1115, %v429
    %v1117 = vperm.slane %v1114, 1
    %v1118 = vmul.f32 %v1117, %v430
    %v1119 = vadd.f32 %v1116, %v1118
    %v1120 = vperm.slane %v1114, 2
    %v1121 = vmul.f32 %v1120, %v431
    %v1122 = vadd.f32 %v1119, %v1121
    %v1123 = vperm.slane %v1114, 3
    %v1124 = vadd.f32 %v1122, %v1123
    %v1125 = vmax.f32 %v1124, 0.0
    %1126 = vmatpush.msra.mxu0 %v556
    %1127 = vmatpush.msra.mxu0 %v554
    %1128 = vmatpush.msra.mxu0 %v552
    %1129 = vmatpush.msra.mxu0 %v550
    %1130 = vmatpush.msra.mxu0 %v548
    %1131 = vmatpush.msra.mxu0 %v546
    %1132 = vmatpush.msra.mxu0 %v544
    %1133 = vmatpush.msra.mxu0 %v542
    %1134 = vmatpush.msra.mxu0 %v540
    %1135 = vmatpush.msra.mxu0 %v538
    %1136 = vmatpush.msra.mxu0 %v536
    %1137 = vmatpush.msra.mxu0 %v534
    %1138 = vmatpush.msra.mxu0 %v532
    %1139 = vmatpush.msra.mxu0 %v530
    %1140 = vmatpush.msra.mxu0 %v528
    %1141 = vmatpush.msra.mxu0 %v526
    %1142 = vmatmul.f32.gmra.mxu0 %v1125
    %v1143 = vpop.f32.mrf.mxu0
    %v1144 = vadd.f32 0.0, %v1143
    %1145 = vdwg.mxu0
    %1146 = vmatpush.msra.mxu0 %v557
    %1147 = vmatpush.msra.mxu0 %v555
    %1148 = vmatpush.msra.mxu0 %v553
    %1149 = vmatpush.msra.mxu0 %v551
    %1150 = vmatpush.msra.mxu0 %v549
    %1151 = vmatpush.msra.mxu0 %v547
    %1152 = vmatpush.msra.mxu0 %v545
    %1153 = vmatpush.msra.mxu0 %v543
    %1154 = vmatpush.msra.mxu0 %v541
    %1155 = vmatpush.msra.mxu0 %v539
    %1156 = vmatpush.msra.mxu0 %v537
    %1157 = vmatpush.msra.mxu0 %v535
    %1158 = vmatpush.msra.mxu0 %v533
    %1159 = vmatpush.msra.mxu0 %v531
    %1160 = vmatpush.msra.mxu0 %v529
    %1161 = vmatpush.msra.mxu0 %v527
    %1162 = vmatmul.f32.gmra.mxu0 %v1125
    %v1163 = vpop.f32.mrf.mxu0
    %v1164 = vadd.f32 0.0, %v1163
    %1165 = vdwg.mxu0
    %1167 = vrot.lane.b32.xlu0 %v1144, 64
    %v1168 = vpop.permute.xlu0 %1167
    %v1170 = vmax.f32 %v1144, %v1168
    %v1171 = vmax.f32 %v1170, %v1164
    %s1172 = scalar_lea.vmem %s9, 384
    %v1173 = vld [vmem:[%s1172] sm:$0xff]
    %v1174 = vld [vmem:[%s1172 + $0x8] sm:$0xff]
    %v1175 = vld [vmem:[%s1172 + $0x10] sm:$0xff]
    %v1176 = vld [vmem:[%s1172 + $0x18] sm:$0xff]
    %v1177 = vld [vmem:[%s1172 + $0x20] sm:$0xff]
    %v1178 = vld [vmem:[%s1172 + $0x28] sm:$0xff]
    %v1179 = vld [vmem:[%s1172 + $0x30] sm:$0xff]
    %v1180 = vld [vmem:[%s1172 + $0x38] sm:$0xff]
    %v1182 = vsel %vm364, %v1171, 0
    %1184 = vmatpush.msra.mxu0 0.0
    %1185 = vmatpush.msra.mxu0 0.0
    %1186 = vmatpush.msra.mxu0 0.0
    %1187 = vmatpush.msra.mxu0 0.0
    %1188 = vmatpush.msra.mxu0 0.0
    %1189 = vmatpush.msra.mxu0 0.0
    %1190 = vmatpush.msra.mxu0 0.0
    %1191 = vmatpush.msra.mxu0 0.0
    %1192 = vmatpush.msra.mxu0 %v1180
    %1193 = vmatpush.msra.mxu0 %v1179
    %1194 = vmatpush.msra.mxu0 %v1178
    %1195 = vmatpush.msra.mxu0 %v1177
    %1196 = vmatpush.msra.mxu0 %v1176
    %1197 = vmatpush.msra.mxu0 %v1175
    %1198 = vmatpush.msra.mxu0 %v1174
    %1199 = vmatpush.msra.mxu0 %v1173
    %1200 = vmatmul.f32.gmra.mxu0 %v1182
    %v1201 = vpop.f32.mrf.mxu0
    %v1202 = vadd.f32 0.0, %v1201
    %1203 = vdwg.mxu0
    %v1204 = vadd.f32 %v1112, %v1202
    %s1205 = scalar_lea.vmem %s8, 28
    %v1206 = vld [vmem:[%s1205] sm:$0xf]
    %v1207 = vperm.slane %v1206, 0
    %v1208 = vmul.f32 %v1207, %v429
    %v1209 = vperm.slane %v1206, 1
    %v1210 = vmul.f32 %v1209, %v430
    %v1211 = vadd.f32 %v1208, %v1210
    %v1212 = vperm.slane %v1206, 2
    %v1213 = vmul.f32 %v1212, %v431
    %v1214 = vadd.f32 %v1211, %v1213
    %v1215 = vperm.slane %v1206, 3
    %v1216 = vadd.f32 %v1214, %v1215
    %v1217 = vmax.f32 %v1216, 0.0
    %1218 = vmatpush.msra.mxu0 %v556
    %1219 = vmatpush.msra.mxu0 %v554
    %1220 = vmatpush.msra.mxu0 %v552
    %1221 = vmatpush.msra.mxu0 %v550
    %1222 = vmatpush.msra.mxu0 %v548
    %1223 = vmatpush.msra.mxu0 %v546
    %1224 = vmatpush.msra.mxu0 %v544
    %1225 = vmatpush.msra.mxu0 %v542
    %1226 = vmatpush.msra.mxu0 %v540
    %1227 = vmatpush.msra.mxu0 %v538
    %1228 = vmatpush.msra.mxu0 %v536
    %1229 = vmatpush.msra.mxu0 %v534
    %1230 = vmatpush.msra.mxu0 %v532
    %1231 = vmatpush.msra.mxu0 %v530
    %1232 = vmatpush.msra.mxu0 %v528
    %1233 = vmatpush.msra.mxu0 %v526
    %1234 = vmatmul.f32.gmra.mxu0 %v1217
    %v1235 = vpop.f32.mrf.mxu0
    %v1236 = vadd.f32 0.0, %v1235
    %1237 = vdwg.mxu0
    %1238 = vmatpush.msra.mxu0 %v557
    %1239 = vmatpush.msra.mxu0 %v555
    %1240 = vmatpush.msra.mxu0 %v553
    %1241 = vmatpush.msra.mxu0 %v551
    %1242 = vmatpush.msra.mxu0 %v549
    %1243 = vmatpush.msra.mxu0 %v547
    %1244 = vmatpush.msra.mxu0 %v545
    %1245 = vmatpush.msra.mxu0 %v543
    %1246 = vmatpush.msra.mxu0 %v541
    %1247 = vmatpush.msra.mxu0 %v539
    %1248 = vmatpush.msra.mxu0 %v537
    %1249 = vmatpush.msra.mxu0 %v535
    %1250 = vmatpush.msra.mxu0 %v533
    %1251 = vmatpush.msra.mxu0 %v531
    %1252 = vmatpush.msra.mxu0 %v529
    %1253 = vmatpush.msra.mxu0 %v527
    %1254 = vmatmul.f32.gmra.mxu0 %v1217
    %v1255 = vpop.f32.mrf.mxu0
    %v1256 = vadd.f32 0.0, %v1255
    %1257 = vdwg.mxu0
    %1259 = vrot.lane.b32.xlu0 %v1236, 64
    %v1260 = vpop.permute.xlu0 %1259
    %v1262 = vmax.f32 %v1236, %v1260
    %v1263 = vmax.f32 %v1262, %v1256
    %s1264 = scalar_lea.vmem %s9, 448
    %v1265 = vld [vmem:[%s1264] sm:$0xff]
    %v1266 = vld [vmem:[%s1264 + $0x8] sm:$0xff]
    %v1267 = vld [vmem:[%s1264 + $0x10] sm:$0xff]
    %v1268 = vld [vmem:[%s1264 + $0x18] sm:$0xff]
    %v1269 = vld [vmem:[%s1264 + $0x20] sm:$0xff]
    %v1270 = vld [vmem:[%s1264 + $0x28] sm:$0xff]
    %v1271 = vld [vmem:[%s1264 + $0x30] sm:$0xff]
    %v1272 = vld [vmem:[%s1264 + $0x38] sm:$0xff]
    %v1274 = vsel %vm364, %v1263, 0
    %1276 = vmatpush.msra.mxu0 0.0
    %1277 = vmatpush.msra.mxu0 0.0
    %1278 = vmatpush.msra.mxu0 0.0
    %1279 = vmatpush.msra.mxu0 0.0
    %1280 = vmatpush.msra.mxu0 0.0
    %1281 = vmatpush.msra.mxu0 0.0
    %1282 = vmatpush.msra.mxu0 0.0
    %1283 = vmatpush.msra.mxu0 0.0
    %1284 = vmatpush.msra.mxu0 %v1272
    %1285 = vmatpush.msra.mxu0 %v1271
    %1286 = vmatpush.msra.mxu0 %v1270
    %1287 = vmatpush.msra.mxu0 %v1269
    %1288 = vmatpush.msra.mxu0 %v1268
    %1289 = vmatpush.msra.mxu0 %v1267
    %1290 = vmatpush.msra.mxu0 %v1266
    %1291 = vmatpush.msra.mxu0 %v1265
    %1292 = vmatmul.f32.gmra.mxu0 %v1274
    %v1293 = vpop.f32.mrf.mxu0
    %v1294 = vadd.f32 0.0, %v1293
    %1295 = vdwg.mxu0
    %v1296 = vadd.f32 %v1204, %v1294
    %vm1297 = vcmask 74752
    %1298 = vst.msk [vmem:[#allocation3] sm:$0x3] %vm1297, %v1296
    // Predicated region
    $region60: #{neural_network_forward.1} parent=1 // pred_check
      _
    $region61: #{neural_network_forward.1} parent=1 // pred_check_branch
      %1300 = sbr.rel (0) target = $region63
    $region62: #{neural_network_forward.1} parent=1 // pred_region
      %1302 = vsyncadd [#allocation4], 0
      %s1304 = sshll.u32 [#allocation3], 4
      %s1305 = int_to_ptr.vmem [resolvable:$true] %s1304
      %s1306 = sshll.u32 %s11, 4
      %s1307 = int_to_ptr.hbm [resolvable:$true] %s1306
      %1309 = dma.vmem_to_hbm [thread:$0]  %s1305, 32, %s1307, [#allocation4]
    $region63: #{neural_network_forward.1} parent=1 // pred_fallthru
      _
    // Predicated region
    $region64: #{neural_network_forward.1} parent=1 // pred_check
      _
    $region65: #{neural_network_forward.1} parent=1 // pred_check_branch
      %1311 = sbr.rel (0) target = $region67
    $region66: #{neural_network_forward.1} parent=1 // pred_region
      %1313 = dma.done [#allocation4], 32
    $region67: #{neural_network_forward.1} parent=1 // pred_fallthru
      _
    %1314 = vsyncpa [#allocation4], 1

</llo_original>
